<compile_context>
chip_gen: v6e
topology: v6e:2x2x1
jax: 0.10.0
libtpu: 0.0.40
codegen_flags: <defaults>
</compile_context>

<pallas_src>
import math

import jax
import jax.numpy as jnp
from jax.experimental import pallas as pl
from jax.experimental.pallas import tpu as pltpu


def _round_up(x, m):
    return ((x + m - 1) // m) * m


def _gelu_exact(x):
    # PyTorch nn.GELU() default == exact erf-based GELU.
    # (On v6e one could switch to the tanh approximation to route the
    #  transcendental to the EUP, but that would change module semantics.)
    return 0.5 * x * (1.0 + jax.lax.erf(x * (1.0 / math.sqrt(2.0))))


def _mlp_kernel(x_ref, b_ref, *rest):
    """rest = (w1_ref, ..., w7_ref, out_ref).

    x_ref  : (TB, in_pad)            f32 batch tile
    b_ref  : (n_layers, max_out_pad) f32 packed bias table (VMEM-resident)
    w*_ref : (in_pad_i, out_pad_i)   bf16 weights (VMEM-resident)
    """
    out_ref = rest[-1]
    w_refs = rest[:-1]
    n_layers = len(w_refs)

    biases = b_ref[...]                       # (n_layers, max_out_pad) f32
    h = x_ref[...].astype(jnp.float32)        # (TB, in_pad) f32
    for i, w_ref in enumerate(w_refs):
        w = w_ref[...]                        # bf16 (or f32) padded weight
        out_d = w.shape[1]
        # MXU matmul: low-precision inputs, f32 accumulation.
        acc = jnp.dot(h.astype(w.dtype), w, preferred_element_type=jnp.float32)
        h = acc + biases[i, :out_d][None, :]  # bias add in f32
        if i < n_layers - 1:                  # last Linear has no activation
            h = _gelu_exact(h)
    out_ref[...] = h.astype(out_ref.dtype)


def _build_call(xp, b_stack, w_list, tb, grid_b, out_pad, *,
                single_buffer_weights, vmem_limit, cost):
    in_pad = xp.shape[1]

    def _resident_spec(shape):
        # Constant index_map -> same block every grid step -> stays resident.
        if single_buffer_weights:
            return pl.BlockSpec(shape, lambda i: (0, 0),
                                pipeline_mode=pl.Buffered(1))
        return pl.BlockSpec(shape, lambda i: (0, 0))

    in_specs = [pl.BlockSpec((tb, in_pad), lambda i: (i, 0)),   # x: batch-tiled
                _resident_spec(b_stack.shape)]                  # packed biases
    in_specs += [_resident_spec(w.shape) for w in w_list]       # weights

    return pl.pallas_call(
        _mlp_kernel,
        out_shape=jax.ShapeDtypeStruct((xp.shape[0], out_pad), jnp.float32),
        grid=(grid_b,),
        in_specs=in_specs,
        out_specs=pl.BlockSpec((tb, out_pad), lambda i: (i, 0)),
        compiler_params=pltpu.CompilerParams(
            dimension_semantics=("parallel",),     # batch tiles are independent
            vmem_limit_bytes=vmem_limit),
        cost_estimate=cost,
    )(xp, b_stack, *w_list)


def ntuple_forward(x, params, *, tb=256, weight_dtype=jnp.bfloat16,
                   single_buffer_weights=True):
    """x: (B, embedding_dim) f32; params: list of (W (in,out) f32, b (1,out) f32)."""
    B, E = x.shape
    n_layers = len(params)
    dims = [E] + [w.shape[1] for (w, _) in params]
    assert all(d >= 1 for d in dims), "zero-width layer: embedding_dim too small"
    pdims = [_round_up(d, 128) for d in dims]   # lane-pad every feature dim

    # Batch tile: multiple of 8 sublanes; pad the batch so TB divides it.
    TB = _round_up(min(tb, _round_up(B, 8)), 8)
    Bp = _round_up(B, TB)

    # Pad input to (Bp, in_pad).
    xp = jnp.pad(x.astype(jnp.float32), ((0, Bp - B), (0, pdims[0] - E)))

    # Pad weights (bf16) and pack biases (f32) into one table.
    max_out = max(pdims[1:])
    b_stack = jnp.zeros((n_layers, max_out), jnp.float32)
    w_list = []
    for i, (w, b) in enumerate(params):
        wp = jnp.pad(w.astype(weight_dtype),
                     ((0, pdims[i] - w.shape[0]), (0, pdims[i + 1] - w.shape[1])))
        w_list.append(wp)
        b_stack = b_stack.at[i, :w.shape[1]].set(b.reshape(-1).astype(jnp.float32))

    # VMEM budget: resident weights/biases (x2 in case double-buffered) +
    # double-buffered x/out tiles + live intermediates + headroom.
    resident_bytes = int(b_stack.nbytes) + sum(int(w.nbytes) for w in w_list)
    io_bytes = 2 * TB * (pdims[0] + pdims[-1]) * 4
    act_bytes = 2 * TB * max(pdims) * 4
    need = 2 * resident_bytes + io_bytes + act_bytes + (8 << 20)
    vmem_limit = int(min(max(need, 32 << 20), 100 << 20))

    # Advisory cost estimate (true, unpadded op counts).
    flops = 2 * B * sum(int(w.shape[0]) * int(w.shape[1]) for (w, _) in params)
    transcendentals = B * sum(int(w.shape[1]) for (w, _) in params[:-1])
    bytes_accessed = int(x.nbytes) + resident_bytes + B * dims[-1] * 4
    cost = pl.CostEstimate(flops=flops, transcendentals=transcendentals,
                           bytes_accessed=bytes_accessed)

    def _run(single_buf):
        return _build_call(xp, b_stack, w_list, TB, Bp // TB, pdims[-1],
                           single_buffer_weights=single_buf,
                           vmem_limit=vmem_limit, cost=cost)

    if single_buffer_weights:
        try:
            out_padded = _run(True)
        except Exception:
            # pipeline_mode=pl.Buffered(1) not supported by this JAX build:
            # fall back to default (double-buffered) resident weights.
            out_padded = _run(False)
    else:
        out_padded = _run(False)

    return out_padded[:B, :dims[-1]]


def init_params(key, embedding_dim, output_dim):
    """Deterministic init matching the module's layer shapes.

    Weights: kaiming_normal_ (std = sqrt(2 / fan_in)), stored transposed (in, out).
    Biases:  PyTorch Linear default U(-1/sqrt(fan_in), 1/sqrt(fan_in)).
    """
    dims = [
        embedding_dim,
        embedding_dim * 4,
        embedding_dim * 2,
        embedding_dim * 1,
        int(embedding_dim * 0.5 // 1),
        int(embedding_dim * 0.25 // 1),
        int(embedding_dim * 0.125 // 1),
        int(output_dim),
    ]
    assert all(d >= 1 for d in dims), "embedding_dim too small: zero-width layer"
    params = []
    for fan_in, fan_out in zip(dims[:-1], dims[1:]):
        key, kw, kb = jax.random.split(key, 3)
        std = math.sqrt(2.0 / fan_in)
        w = std * jax.random.normal(kw, (fan_in, fan_out), dtype=jnp.float32)
        bound = 1.0 / math.sqrt(fan_in)
        b = jax.random.uniform(kb, (1, fan_out), minval=-bound, maxval=bound,
                               dtype=jnp.float32)
        params.append((w, b))
    return params


def reference_forward_f32(x, params):
    """Pure f32 reference == PyTorch module forward."""
    h = x.astype(jnp.float32)
    n = len(params)
    for i, (w, b) in enumerate(params):
        h = h @ w + b
        if i < n - 1:
            h = _gelu_exact(h)
    return h


def reference_forward_bf16(x, params):
    """Reference mimicking the kernel numerics: bf16 matmul inputs, f32 accum/GELU."""
    h = x.astype(jnp.float32)
    n = len(params)
    for i, (w, b) in enumerate(params):
        h = jnp.dot(h.astype(jnp.bfloat16), w.astype(jnp.bfloat16),
                    preferred_element_type=jnp.float32) + b.astype(jnp.float32)
        if i < n - 1:
            h = _gelu_exact(h)
    return h


if __name__ == "__main__":
    embedding_dim = 32
    output_dim = 8
    batch = 16

    key = jax.random.PRNGKey(0)
    key, kx = jax.random.split(key)
    x = jax.random.normal(kx, (batch, embedding_dim), dtype=jnp.float32)

    params = init_params(key, embedding_dim, output_dim)

    # tb=8 -> 2 batch tiles, exercising the pipelined / parallel grid axis.
    out = ntuple_forward(x, params, tb=8)
    out = jax.block_until_ready(out)

    assert out.shape == (batch, output_dim)

    ref_bf16 = reference_forward_bf16(x, params)   # same numerics as kernel
    ref_f32 = reference_forward_f32(x, params)     # exact module semantics

    assert jnp.allclose(out, ref_bf16, atol=2e-3, rtol=2e-3), (
        "kernel mismatch vs bf16-matmul reference")
    assert jnp.allclose(out, ref_f32, atol=5e-2, rtol=5e-2), (
        "kernel drifted too far from f32 reference")

    print("KERNEL_OK")
</pallas_src>

<mosaic_0001>
module attributes {stable_mosaic.version = 11 : i64} {
  func.func @_mlp_kernel(%arg0: i32, %arg1: memref<8x128xf32, #tpu.memory_space<vmem>>, %arg2: memref<7x128xf32, #tpu.memory_space<vmem>>, %arg3: memref<128x128xbf16, #tpu.memory_space<vmem>>, %arg4: memref<128x128xbf16, #tpu.memory_space<vmem>>, %arg5: memref<128x128xbf16, #tpu.memory_space<vmem>>, %arg6: memref<128x128xbf16, #tpu.memory_space<vmem>>, %arg7: memref<128x128xbf16, #tpu.memory_space<vmem>>, %arg8: memref<128x128xbf16, #tpu.memory_space<vmem>>, %arg9: memref<128x128xbf16, #tpu.memory_space<vmem>>, %arg10: memref<8x128xf32, #tpu.memory_space<vmem>>) attributes {dimension_semantics = [#tpu.dimension_semantics<parallel>], iteration_bounds = array<i64: 2>, scalar_prefetch = 0 : i64, scratch_operands = 0 : i64, tpu.core_type = #tpu.core_type<tc>, window_params = [{transform_indices = @transform_0, window_bounds = array<i64: 8, 128>}, {pipeline_mode = #tpu.pipeline_mode<synchronous>, transform_indices = @transform_1, window_bounds = array<i64: 7, 128>}, {pipeline_mode = #tpu.pipeline_mode<synchronous>, transform_indices = @transform_2, window_bounds = array<i64: 128, 128>}, {pipeline_mode = #tpu.pipeline_mode<synchronous>, transform_indices = @transform_3, window_bounds = array<i64: 128, 128>}, {pipeline_mode = #tpu.pipeline_mode<synchronous>, transform_indices = @transform_4, window_bounds = array<i64: 128, 128>}, {pipeline_mode = #tpu.pipeline_mode<synchronous>, transform_indices = @transform_5, window_bounds = array<i64: 128, 128>}, {pipeline_mode = #tpu.pipeline_mode<synchronous>, transform_indices = @transform_6, window_bounds = array<i64: 128, 128>}, {pipeline_mode = #tpu.pipeline_mode<synchronous>, transform_indices = @transform_7, window_bounds = array<i64: 128, 128>}, {pipeline_mode = #tpu.pipeline_mode<synchronous>, transform_indices = @transform_8, window_bounds = array<i64: 128, 128>}, {transform_indices = @transform_9, window_bounds = array<i64: 8, 128>}]} {
    %c0 = arith.constant 0 : index
    %c0_0 = arith.constant 0 : index
    %0 = vector.load %arg2[%c0, %c0_0] : memref<7x128xf32, #tpu.memory_space<vmem>>, vector<7x128xf32>
    %c0_1 = arith.constant 0 : index
    %c0_2 = arith.constant 0 : index
    %1 = vector.load %arg1[%c0_1, %c0_2] : memref<8x128xf32, #tpu.memory_space<vmem>>, vector<8x128xf32>
    %c0_3 = arith.constant 0 : index
    %c0_4 = arith.constant 0 : index
    %2 = vector.load %arg3[%c0_3, %c0_4] : memref<128x128xbf16, #tpu.memory_space<vmem>>, vector<128x128xbf16>
    %3 = arith.truncf %1 : vector<8x128xf32> to vector<8x128xbf16>
    %cst = arith.constant dense<0.000000e+00> : vector<8x128xf32>
    %4 = tpu.matmul %3, %2, %cst {dimension_numbers = #tpu.dot_dimension_numbers<[1], [0], [0], [1], [0, 0, 1, 1], [], []>} : vector<8x128xbf16>, vector<128x128xbf16>, vector<8x128xf32> -> vector<8x128xf32>
    %5 = vector.extract_strided_slice %0 {offsets = [0, 0], sizes = [1, 128], strides = [1, 1]} : vector<7x128xf32> to vector<1x128xf32>
    %6 = vector.shape_cast %5 : vector<1x128xf32> to vector<128xf32>
    %7 = vector.shape_cast %6 : vector<128xf32> to vector<1x128xf32>
    %8 = vector.broadcast %7 : vector<1x128xf32> to vector<8x128xf32>
    %9 = arith.addf %4, %8 : vector<8x128xf32>
    %cst_5 = arith.constant 5.000000e-01 : f32
    %10 = vector.broadcast %cst_5 : f32 to vector<8x128xf32>
    %11 = arith.mulf %10, %9 : vector<8x128xf32>
    %cst_6 = arith.constant 0.707106769 : f32
    %12 = vector.broadcast %cst_6 : f32 to vector<8x128xf32>
    %13 = arith.mulf %9, %12 : vector<8x128xf32>
    %14 = math.erf %13 : vector<8x128xf32>
    %cst_7 = arith.constant 1.000000e+00 : f32
    %15 = vector.broadcast %cst_7 : f32 to vector<8x128xf32>
    %16 = arith.addf %15, %14 : vector<8x128xf32>
    %17 = arith.mulf %11, %16 : vector<8x128xf32>
    %c0_8 = arith.constant 0 : index
    %c0_9 = arith.constant 0 : index
    %18 = vector.load %arg4[%c0_8, %c0_9] : memref<128x128xbf16, #tpu.memory_space<vmem>>, vector<128x128xbf16>
    %19 = arith.truncf %17 : vector<8x128xf32> to vector<8x128xbf16>
    %cst_10 = arith.constant dense<0.000000e+00> : vector<8x128xf32>
    %20 = tpu.matmul %19, %18, %cst_10 {dimension_numbers = #tpu.dot_dimension_numbers<[1], [0], [0], [1], [0, 0, 1, 1], [], []>} : vector<8x128xbf16>, vector<128x128xbf16>, vector<8x128xf32> -> vector<8x128xf32>
    %21 = vector.extract_strided_slice %0 {offsets = [1, 0], sizes = [1, 128], strides = [1, 1]} : vector<7x128xf32> to vector<1x128xf32>
    %22 = vector.shape_cast %21 : vector<1x128xf32> to vector<128xf32>
    %23 = vector.shape_cast %22 : vector<128xf32> to vector<1x128xf32>
    %24 = vector.broadcast %23 : vector<1x128xf32> to vector<8x128xf32>
    %25 = arith.addf %20, %24 : vector<8x128xf32>
    %cst_11 = arith.constant 5.000000e-01 : f32
    %26 = vector.broadcast %cst_11 : f32 to vector<8x128xf32>
    %27 = arith.mulf %26, %25 : vector<8x128xf32>
    %cst_12 = arith.constant 0.707106769 : f32
    %28 = vector.broadcast %cst_12 : f32 to vector<8x128xf32>
    %29 = arith.mulf %25, %28 : vector<8x128xf32>
    %30 = math.erf %29 : vector<8x128xf32>
    %cst_13 = arith.constant 1.000000e+00 : f32
    %31 = vector.broadcast %cst_13 : f32 to vector<8x128xf32>
    %32 = arith.addf %31, %30 : vector<8x128xf32>
    %33 = arith.mulf %27, %32 : vector<8x128xf32>
    %c0_14 = arith.constant 0 : index
    %c0_15 = arith.constant 0 : index
    %34 = vector.load %arg5[%c0_14, %c0_15] : memref<128x128xbf16, #tpu.memory_space<vmem>>, vector<128x128xbf16>
    %35 = arith.truncf %33 : vector<8x128xf32> to vector<8x128xbf16>
    %cst_16 = arith.constant dense<0.000000e+00> : vector<8x128xf32>
    %36 = tpu.matmul %35, %34, %cst_16 {dimension_numbers = #tpu.dot_dimension_numbers<[1], [0], [0], [1], [0, 0, 1, 1], [], []>} : vector<8x128xbf16>, vector<128x128xbf16>, vector<8x128xf32> -> vector<8x128xf32>
    %37 = vector.extract_strided_slice %0 {offsets = [2, 0], sizes = [1, 128], strides = [1, 1]} : vector<7x128xf32> to vector<1x128xf32>
    %38 = vector.shape_cast %37 : vector<1x128xf32> to vector<128xf32>
    %39 = vector.shape_cast %38 : vector<128xf32> to vector<1x128xf32>
    %40 = vector.broadcast %39 : vector<1x128xf32> to vector<8x128xf32>
    %41 = arith.addf %36, %40 : vector<8x128xf32>
    %cst_17 = arith.constant 5.000000e-01 : f32
    %42 = vector.broadcast %cst_17 : f32 to vector<8x128xf32>
    %43 = arith.mulf %42, %41 : vector<8x128xf32>
    %cst_18 = arith.constant 0.707106769 : f32
    %44 = vector.broadcast %cst_18 : f32 to vector<8x128xf32>
    %45 = arith.mulf %41, %44 : vector<8x128xf32>
    %46 = math.erf %45 : vector<8x128xf32>
    %cst_19 = arith.constant 1.000000e+00 : f32
    %47 = vector.broadcast %cst_19 : f32 to vector<8x128xf32>
    %48 = arith.addf %47, %46 : vector<8x128xf32>
    %49 = arith.mulf %43, %48 : vector<8x128xf32>
    %c0_20 = arith.constant 0 : index
    %c0_21 = arith.constant 0 : index
    %50 = vector.load %arg6[%c0_20, %c0_21] : memref<128x128xbf16, #tpu.memory_space<vmem>>, vector<128x128xbf16>
    %51 = arith.truncf %49 : vector<8x128xf32> to vector<8x128xbf16>
    %cst_22 = arith.constant dense<0.000000e+00> : vector<8x128xf32>
    %52 = tpu.matmul %51, %50, %cst_22 {dimension_numbers = #tpu.dot_dimension_numbers<[1], [0], [0], [1], [0, 0, 1, 1], [], []>} : vector<8x128xbf16>, vector<128x128xbf16>, vector<8x128xf32> -> vector<8x128xf32>
    %53 = vector.extract_strided_slice %0 {offsets = [3, 0], sizes = [1, 128], strides = [1, 1]} : vector<7x128xf32> to vector<1x128xf32>
    %54 = vector.shape_cast %53 : vector<1x128xf32> to vector<128xf32>
    %55 = vector.shape_cast %54 : vector<128xf32> to vector<1x128xf32>
    %56 = vector.broadcast %55 : vector<1x128xf32> to vector<8x128xf32>
    %57 = arith.addf %52, %56 : vector<8x128xf32>
    %cst_23 = arith.constant 5.000000e-01 : f32
    %58 = vector.broadcast %cst_23 : f32 to vector<8x128xf32>
    %59 = arith.mulf %58, %57 : vector<8x128xf32>
    %cst_24 = arith.constant 0.707106769 : f32
    %60 = vector.broadcast %cst_24 : f32 to vector<8x128xf32>
    %61 = arith.mulf %57, %60 : vector<8x128xf32>
    %62 = math.erf %61 : vector<8x128xf32>
    %cst_25 = arith.constant 1.000000e+00 : f32
    %63 = vector.broadcast %cst_25 : f32 to vector<8x128xf32>
    %64 = arith.addf %63, %62 : vector<8x128xf32>
    %65 = arith.mulf %59, %64 : vector<8x128xf32>
    %c0_26 = arith.constant 0 : index
    %c0_27 = arith.constant 0 : index
    %66 = vector.load %arg7[%c0_26, %c0_27] : memref<128x128xbf16, #tpu.memory_space<vmem>>, vector<128x128xbf16>
    %67 = arith.truncf %65 : vector<8x128xf32> to vector<8x128xbf16>
    %cst_28 = arith.constant dense<0.000000e+00> : vector<8x128xf32>
    %68 = tpu.matmul %67, %66, %cst_28 {dimension_numbers = #tpu.dot_dimension_numbers<[1], [0], [0], [1], [0, 0, 1, 1], [], []>} : vector<8x128xbf16>, vector<128x128xbf16>, vector<8x128xf32> -> vector<8x128xf32>
    %69 = vector.extract_strided_slice %0 {offsets = [4, 0], sizes = [1, 128], strides = [1, 1]} : vector<7x128xf32> to vector<1x128xf32>
    %70 = vector.shape_cast %69 : vector<1x128xf32> to vector<128xf32>
    %71 = vector.shape_cast %70 : vector<128xf32> to vector<1x128xf32>
    %72 = vector.broadcast %71 : vector<1x128xf32> to vector<8x128xf32>
    %73 = arith.addf %68, %72 : vector<8x128xf32>
    %cst_29 = arith.constant 5.000000e-01 : f32
    %74 = vector.broadcast %cst_29 : f32 to vector<8x128xf32>
    %75 = arith.mulf %74, %73 : vector<8x128xf32>
    %cst_30 = arith.constant 0.707106769 : f32
    %76 = vector.broadcast %cst_30 : f32 to vector<8x128xf32>
    %77 = arith.mulf %73, %76 : vector<8x128xf32>
    %78 = math.erf %77 : vector<8x128xf32>
    %cst_31 = arith.constant 1.000000e+00 : f32
    %79 = vector.broadcast %cst_31 : f32 to vector<8x128xf32>
    %80 = arith.addf %79, %78 : vector<8x128xf32>
    %81 = arith.mulf %75, %80 : vector<8x128xf32>
    %c0_32 = arith.constant 0 : index
    %c0_33 = arith.constant 0 : index
    %82 = vector.load %arg8[%c0_32, %c0_33] : memref<128x128xbf16, #tpu.memory_space<vmem>>, vector<128x128xbf16>
    %83 = arith.truncf %81 : vector<8x128xf32> to vector<8x128xbf16>
    %cst_34 = arith.constant dense<0.000000e+00> : vector<8x128xf32>
    %84 = tpu.matmul %83, %82, %cst_34 {dimension_numbers = #tpu.dot_dimension_numbers<[1], [0], [0], [1], [0, 0, 1, 1], [], []>} : vector<8x128xbf16>, vector<128x128xbf16>, vector<8x128xf32> -> vector<8x128xf32>
    %85 = vector.extract_strided_slice %0 {offsets = [5, 0], sizes = [1, 128], strides = [1, 1]} : vector<7x128xf32> to vector<1x128xf32>
    %86 = vector.shape_cast %85 : vector<1x128xf32> to vector<128xf32>
    %87 = vector.shape_cast %86 : vector<128xf32> to vector<1x128xf32>
    %88 = vector.broadcast %87 : vector<1x128xf32> to vector<8x128xf32>
    %89 = arith.addf %84, %88 : vector<8x128xf32>
    %cst_35 = arith.constant 5.000000e-01 : f32
    %90 = vector.broadcast %cst_35 : f32 to vector<8x128xf32>
    %91 = arith.mulf %90, %89 : vector<8x128xf32>
    %cst_36 = arith.constant 0.707106769 : f32
    %92 = vector.broadcast %cst_36 : f32 to vector<8x128xf32>
    %93 = arith.mulf %89, %92 : vector<8x128xf32>
    %94 = math.erf %93 : vector<8x128xf32>
    %cst_37 = arith.constant 1.000000e+00 : f32
    %95 = vector.broadcast %cst_37 : f32 to vector<8x128xf32>
    %96 = arith.addf %95, %94 : vector<8x128xf32>
    %97 = arith.mulf %91, %96 : vector<8x128xf32>
    %c0_38 = arith.constant 0 : index
    %c0_39 = arith.constant 0 : index
    %98 = vector.load %arg9[%c0_38, %c0_39] : memref<128x128xbf16, #tpu.memory_space<vmem>>, vector<128x128xbf16>
    %99 = arith.truncf %97 : vector<8x128xf32> to vector<8x128xbf16>
    %cst_40 = arith.constant dense<0.000000e+00> : vector<8x128xf32>
    %100 = tpu.matmul %99, %98, %cst_40 {dimension_numbers = #tpu.dot_dimension_numbers<[1], [0], [0], [1], [0, 0, 1, 1], [], []>} : vector<8x128xbf16>, vector<128x128xbf16>, vector<8x128xf32> -> vector<8x128xf32>
    %101 = vector.extract_strided_slice %0 {offsets = [6, 0], sizes = [1, 128], strides = [1, 1]} : vector<7x128xf32> to vector<1x128xf32>
    %102 = vector.shape_cast %101 : vector<1x128xf32> to vector<128xf32>
    %103 = vector.shape_cast %102 : vector<128xf32> to vector<1x128xf32>
    %104 = vector.broadcast %103 : vector<1x128xf32> to vector<8x128xf32>
    %105 = arith.addf %100, %104 : vector<8x128xf32>
    %c0_41 = arith.constant 0 : index
    %c0_42 = arith.constant 0 : index
    %106 = vector.load %arg10[%c0_41, %c0_42] : memref<8x128xf32, #tpu.memory_space<vmem>>, vector<8x128xf32>
    tpu.vector_store %arg10[%c0_41, %c0_42], %105 {strides = array<i32>} : memref<8x128xf32, #tpu.memory_space<vmem>>, vector<8x128xf32>,
    return
  }
  func.func @transform_0(%arg0: i32) -> (i32, i32) {
    %c0_i32 = arith.constant 0 : i32
    %c0_i32_0 = arith.constant 0 : i32
    return %arg0, %c0_i32 : i32, i32
  }
  func.func @transform_1(%arg0: i32) -> (i32, i32) {
    %c0_i32 = arith.constant 0 : i32
    %c0_i32_0 = arith.constant 0 : i32
    %c0_i32_1 = arith.constant 0 : i32
    return %c0_i32, %c0_i32_0 : i32, i32
  }
  func.func @transform_2(%arg0: i32) -> (i32, i32) {
    %c0_i32 = arith.constant 0 : i32
    %c0_i32_0 = arith.constant 0 : i32
    %c0_i32_1 = arith.constant 0 : i32
    return %c0_i32, %c0_i32_0 : i32, i32
  }
  func.func @transform_3(%arg0: i32) -> (i32, i32) {
    %c0_i32 = arith.constant 0 : i32
    %c0_i32_0 = arith.constant 0 : i32
    %c0_i32_1 = arith.constant 0 : i32
    return %c0_i32, %c0_i32_0 : i32, i32
  }
  func.func @transform_4(%arg0: i32) -> (i32, i32) {
    %c0_i32 = arith.constant 0 : i32
    %c0_i32_0 = arith.constant 0 : i32
    %c0_i32_1 = arith.constant 0 : i32
    return %c0_i32, %c0_i32_0 : i32, i32
  }
  func.func @transform_5(%arg0: i32) -> (i32, i32) {
    %c0_i32 = arith.constant 0 : i32
    %c0_i32_0 = arith.constant 0 : i32
    %c0_i32_1 = arith.constant 0 : i32
    return %c0_i32, %c0_i32_0 : i32, i32
  }
  func.func @transform_6(%arg0: i32) -> (i32, i32) {
    %c0_i32 = arith.constant 0 : i32
    %c0_i32_0 = arith.constant 0 : i32
    %c0_i32_1 = arith.constant 0 : i32
    return %c0_i32, %c0_i32_0 : i32, i32
  }
  func.func @transform_7(%arg0: i32) -> (i32, i32) {
    %c0_i32 = arith.constant 0 : i32
    %c0_i32_0 = arith.constant 0 : i32
    %c0_i32_1 = arith.constant 0 : i32
    return %c0_i32, %c0_i32_0 : i32, i32
  }
  func.func @transform_8(%arg0: i32) -> (i32, i32) {
    %c0_i32 = arith.constant 0 : i32
    %c0_i32_0 = arith.constant 0 : i32
    %c0_i32_1 = arith.constant 0 : i32
    return %c0_i32, %c0_i32_0 : i32, i32
  }
  func.func @transform_9(%arg0: i32) -> (i32, i32) {
    %c0_i32 = arith.constant 0 : i32
    %c0_i32_0 = arith.constant 0 : i32
    return %arg0, %c0_i32 : i32, i32
  }
}

module attributes {stable_mosaic.version = 11 : i64} {
  func.func @_mlp_kernel(%arg0: i32, %arg1: memref<8x128xf32, #tpu.memory_space<vmem>>, %arg2: memref<7x128xf32, #tpu.memory_space<vmem>>, %arg3: memref<128x128xbf16, #tpu.memory_space<vmem>>, %arg4: memref<128x128xbf16, #tpu.memory_space<vmem>>, %arg5: memref<128x128xbf16, #tpu.memory_space<vmem>>, %arg6: memref<128x128xbf16, #tpu.memory_space<vmem>>, %arg7: memref<128x128xbf16, #tpu.memory_space<vmem>>, %arg8: memref<128x128xbf16, #tpu.memory_space<vmem>>, %arg9: memref<128x128xbf16, #tpu.memory_space<vmem>>, %arg10: memref<8x128xf32, #tpu.memory_space<vmem>>) attributes {dimension_semantics = [#tpu.dimension_semantics<parallel>], iteration_bounds = array<i64: 2>, scalar_prefetch = 0 : i64, scratch_operands = 0 : i64, tpu.core_type = #tpu.core_type<tc>, window_params = [{transform_indices = @transform_0, window_bounds = array<i64: 8, 128>}, {pipeline_mode = #tpu.pipeline_mode<synchronous>, transform_indices = @transform_1, window_bounds = array<i64: 7, 128>}, {pipeline_mode = #tpu.pipeline_mode<synchronous>, transform_indices = @transform_2, window_bounds = array<i64: 128, 128>}, {pipeline_mode = #tpu.pipeline_mode<synchronous>, transform_indices = @transform_3, window_bounds = array<i64: 128, 128>}, {pipeline_mode = #tpu.pipeline_mode<synchronous>, transform_indices = @transform_4, window_bounds = array<i64: 128, 128>}, {pipeline_mode = #tpu.pipeline_mode<synchronous>, transform_indices = @transform_5, window_bounds = array<i64: 128, 128>}, {pipeline_mode = #tpu.pipeline_mode<synchronous>, transform_indices = @transform_6, window_bounds = array<i64: 128, 128>}, {pipeline_mode = #tpu.pipeline_mode<synchronous>, transform_indices = @transform_7, window_bounds = array<i64: 128, 128>}, {pipeline_mode = #tpu.pipeline_mode<synchronous>, transform_indices = @transform_8, window_bounds = array<i64: 128, 128>}, {transform_indices = @transform_9, window_bounds = array<i64: 8, 128>}]} {
    %c0 = arith.constant 0 : index
    %c0_0 = arith.constant 0 : index
    %0 = vector.load %arg2[%c0, %c0_0] : memref<7x128xf32, #tpu.memory_space<vmem>>, vector<7x128xf32>
    %c0_1 = arith.constant 0 : index
    %c0_2 = arith.constant 0 : index
    %1 = vector.load %arg1[%c0_1, %c0_2] : memref<8x128xf32, #tpu.memory_space<vmem>>, vector<8x128xf32>
    %c0_3 = arith.constant 0 : index
    %c0_4 = arith.constant 0 : index
    %2 = vector.load %arg3[%c0_3, %c0_4] : memref<128x128xbf16, #tpu.memory_space<vmem>>, vector<128x128xbf16>
    %3 = arith.truncf %1 : vector<8x128xf32> to vector<8x128xbf16>
    %cst = arith.constant dense<0.000000e+00> : vector<8x128xf32>
    %4 = tpu.matmul %3, %2, %cst {dimension_numbers = #tpu.dot_dimension_numbers<[1], [0], [0], [1], [0, 0, 1, 1], [], []>} : vector<8x128xbf16>, vector<128x128xbf16>, vector<8x128xf32> -> vector<8x128xf32>
    %5 = vector.extract_strided_slice %0 {offsets = [0, 0], sizes = [1, 128], strides = [1, 1]} : vector<7x128xf32> to vector<1x128xf32>
    %6 = vector.shape_cast %5 : vector<1x128xf32> to vector<128xf32>
    %7 = vector.shape_cast %6 : vector<128xf32> to vector<1x128xf32>
    %8 = vector.broadcast %7 : vector<1x128xf32> to vector<8x128xf32>
    %9 = arith.addf %4, %8 : vector<8x128xf32>
    %cst_5 = arith.constant 5.000000e-01 : f32
    %10 = vector.broadcast %cst_5 : f32 to vector<8x128xf32>
    %11 = arith.mulf %10, %9 : vector<8x128xf32>
    %cst_6 = arith.constant 0.707106769 : f32
    %12 = vector.broadcast %cst_6 : f32 to vector<8x128xf32>
    %13 = arith.mulf %9, %12 : vector<8x128xf32>
    %14 = math.erf %13 : vector<8x128xf32>
    %cst_7 = arith.constant 1.000000e+00 : f32
    %15 = vector.broadcast %cst_7 : f32 to vector<8x128xf32>
    %16 = arith.addf %15, %14 : vector<8x128xf32>
    %17 = arith.mulf %11, %16 : vector<8x128xf32>
    %c0_8 = arith.constant 0 : index
    %c0_9 = arith.constant 0 : index
    %18 = vector.load %arg4[%c0_8, %c0_9] : memref<128x128xbf16, #tpu.memory_space<vmem>>, vector<128x128xbf16>
    %19 = arith.truncf %17 : vector<8x128xf32> to vector<8x128xbf16>
    %cst_10 = arith.constant dense<0.000000e+00> : vector<8x128xf32>
    %20 = tpu.matmul %19, %18, %cst_10 {dimension_numbers = #tpu.dot_dimension_numbers<[1], [0], [0], [1], [0, 0, 1, 1], [], []>} : vector<8x128xbf16>, vector<128x128xbf16>, vector<8x128xf32> -> vector<8x128xf32>
    %21 = vector.extract_strided_slice %0 {offsets = [1, 0], sizes = [1, 128], strides = [1, 1]} : vector<7x128xf32> to vector<1x128xf32>
    %22 = vector.shape_cast %21 : vector<1x128xf32> to vector<128xf32>
    %23 = vector.shape_cast %22 : vector<128xf32> to vector<1x128xf32>
    %24 = vector.broadcast %23 : vector<1x128xf32> to vector<8x128xf32>
    %25 = arith.addf %20, %24 : vector<8x128xf32>
    %cst_11 = arith.constant 5.000000e-01 : f32
    %26 = vector.broadcast %cst_11 : f32 to vector<8x128xf32>
    %27 = arith.mulf %26, %25 : vector<8x128xf32>
    %cst_12 = arith.constant 0.707106769 : f32
    %28 = vector.broadcast %cst_12 : f32 to vector<8x128xf32>
    %29 = arith.mulf %25, %28 : vector<8x128xf32>
    %30 = math.erf %29 : vector<8x128xf32>
    %cst_13 = arith.constant 1.000000e+00 : f32
    %31 = vector.broadcast %cst_13 : f32 to vector<8x128xf32>
    %32 = arith.addf %31, %30 : vector<8x128xf32>
    %33 = arith.mulf %27, %32 : vector<8x128xf32>
    %c0_14 = arith.constant 0 : index
    %c0_15 = arith.constant 0 : index
    %34 = vector.load %arg5[%c0_14, %c0_15] : memref<128x128xbf16, #tpu.memory_space<vmem>>, vector<128x128xbf16>
    %35 = arith.truncf %33 : vector<8x128xf32> to vector<8x128xbf16>
    %cst_16 = arith.constant dense<0.000000e+00> : vector<8x128xf32>
    %36 = tpu.matmul %35, %34, %cst_16 {dimension_numbers = #tpu.dot_dimension_numbers<[1], [0], [0], [1], [0, 0, 1, 1], [], []>} : vector<8x128xbf16>, vector<128x128xbf16>, vector<8x128xf32> -> vector<8x128xf32>
    %37 = vector.extract_strided_slice %0 {offsets = [2, 0], sizes = [1, 128], strides = [1, 1]} : vector<7x128xf32> to vector<1x128xf32>
    %38 = vector.shape_cast %37 : vector<1x128xf32> to vector<128xf32>
    %39 = vector.shape_cast %38 : vector<128xf32> to vector<1x128xf32>
    %40 = vector.broadcast %39 : vector<1x128xf32> to vector<8x128xf32>
    %41 = arith.addf %36, %40 : vector<8x128xf32>
    %cst_17 = arith.constant 5.000000e-01 : f32
    %42 = vector.broadcast %cst_17 : f32 to vector<8x128xf32>
    %43 = arith.mulf %42, %41 : vector<8x128xf32>
    %cst_18 = arith.constant 0.707106769 : f32
    %44 = vector.broadcast %cst_18 : f32 to vector<8x128xf32>
    %45 = arith.mulf %41, %44 : vector<8x128xf32>
    %46 = math.erf %45 : vector<8x128xf32>
    %cst_19 = arith.constant 1.000000e+00 : f32
    %47 = vector.broadcast %cst_19 : f32 to vector<8x128xf32>
    %48 = arith.addf %47, %46 : vector<8x128xf32>
    %49 = arith.mulf %43, %48 : vector<8x128xf32>
    %c0_20 = arith.constant 0 : index
    %c0_21 = arith.constant 0 : index
    %50 = vector.load %arg6[%c0_20, %c0_21] : memref<128x128xbf16, #tpu.memory_space<vmem>>, vector<128x128xbf16>
    %51 = arith.truncf %49 : vector<8x128xf32> to vector<8x128xbf16>
    %cst_22 = arith.constant dense<0.000000e+00> : vector<8x128xf32>
    %52 = tpu.matmul %51, %50, %cst_22 {dimension_numbers = #tpu.dot_dimension_numbers<[1], [0], [0], [1], [0, 0, 1, 1], [], []>} : vector<8x128xbf16>, vector<128x128xbf16>, vector<8x128xf32> -> vector<8x128xf32>
    %53 = vector.extract_strided_slice %0 {offsets = [3, 0], sizes = [1, 128], strides = [1, 1]} : vector<7x128xf32> to vector<1x128xf32>
    %54 = vector.shape_cast %53 : vector<1x128xf32> to vector<128xf32>
    %55 = vector.shape_cast %54 : vector<128xf32> to vector<1x128xf32>
    %56 = vector.broadcast %55 : vector<1x128xf32> to vector<8x128xf32>
    %57 = arith.addf %52, %56 : vector<8x128xf32>
    %cst_23 = arith.constant 5.000000e-01 : f32
    %58 = vector.broadcast %cst_23 : f32 to vector<8x128xf32>
    %59 = arith.mulf %58, %57 : vector<8x128xf32>
    %cst_24 = arith.constant 0.707106769 : f32
    %60 = vector.broadcast %cst_24 : f32 to vector<8x128xf32>
    %61 = arith.mulf %57, %60 : vector<8x128xf32>
    %62 = math.erf %61 : vector<8x128xf32>
    %cst_25 = arith.constant 1.000000e+00 : f32
    %63 = vector.broadcast %cst_25 : f32 to vector<8x128xf32>
    %64 = arith.addf %63, %62 : vector<8x128xf32>
    %65 = arith.mulf %59, %64 : vector<8x128xf32>
    %c0_26 = arith.constant 0 : index
    %c0_27 = arith.constant 0 : index
    %66 = vector.load %arg7[%c0_26, %c0_27] : memref<128x128xbf16, #tpu.memory_space<vmem>>, vector<128x128xbf16>
    %67 = arith.truncf %65 : vector<8x128xf32> to vector<8x128xbf16>
    %cst_28 = arith.constant dense<0.000000e+00> : vector<8x128xf32>
    %68 = tpu.matmul %67, %66, %cst_28 {dimension_numbers = #tpu.dot_dimension_numbers<[1], [0], [0], [1], [0, 0, 1, 1], [], []>} : vector<8x128xbf16>, vector<128x128xbf16>, vector<8x128xf32> -> vector<8x128xf32>
    %69 = vector.extract_strided_slice %0 {offsets = [4, 0], sizes = [1, 128], strides = [1, 1]} : vector<7x128xf32> to vector<1x128xf32>
    %70 = vector.shape_cast %69 : vector<1x128xf32> to vector<128xf32>
    %71 = vector.shape_cast %70 : vector<128xf32> to vector<1x128xf32>
    %72 = vector.broadcast %71 : vector<1x128xf32> to vector<8x128xf32>
    %73 = arith.addf %68, %72 : vector<8x128xf32>
    %cst_29 = arith.constant 5.000000e-01 : f32
    %74 = vector.broadcast %cst_29 : f32 to vector<8x128xf32>
    %75 = arith.mulf %74, %73 : vector<8x128xf32>
    %cst_30 = arith.constant 0.707106769 : f32
    %76 = vector.broadcast %cst_30 : f32 to vector<8x128xf32>
    %77 = arith.mulf %73, %76 : vector<8x128xf32>
    %78 = math.erf %77 : vector<8x128xf32>
    %cst_31 = arith.constant 1.000000e+00 : f32
    %79 = vector.broadcast %cst_31 : f32 to vector<8x128xf32>
    %80 = arith.addf %79, %78 : vector<8x128xf32>
    %81 = arith.mulf %75, %80 : vector<8x128xf32>
    %c0_32 = arith.constant 0 : index
    %c0_33 = arith.constant 0 : index
    %82 = vector.load %arg8[%c0_32, %c0_33] : memref<128x128xbf16, #tpu.memory_space<vmem>>, vector<128x128xbf16>
    %83 = arith.truncf %81 : vector<8x128xf32> to vector<8x128xbf16>
    %cst_34 = arith.constant dense<0.000000e+00> : vector<8x128xf32>
    %84 = tpu.matmul %83, %82, %cst_34 {dimension_numbers = #tpu.dot_dimension_numbers<[1], [0], [0], [1], [0, 0, 1, 1], [], []>} : vector<8x128xbf16>, vector<128x128xbf16>, vector<8x128xf32> -> vector<8x128xf32>
    %85 = vector.extract_strided_slice %0 {offsets = [5, 0], sizes = [1, 128], strides = [1, 1]} : vector<7x128xf32> to vector<1x128xf32>
    %86 = vector.shape_cast %85 : vector<1x128xf32> to vector<128xf32>
    %87 = vector.shape_cast %86 : vector<128xf32> to vector<1x128xf32>
    %88 = vector.broadcast %87 : vector<1x128xf32> to vector<8x128xf32>
    %89 = arith.addf %84, %88 : vector<8x128xf32>
    %cst_35 = arith.constant 5.000000e-01 : f32
    %90 = vector.broadcast %cst_35 : f32 to vector<8x128xf32>
    %91 = arith.mulf %90, %89 : vector<8x128xf32>
    %cst_36 = arith.constant 0.707106769 : f32
    %92 = vector.broadcast %cst_36 : f32 to vector<8x128xf32>
    %93 = arith.mulf %89, %92 : vector<8x128xf32>
    %94 = math.erf %93 : vector<8x128xf32>
    %cst_37 = arith.constant 1.000000e+00 : f32
    %95 = vector.broadcast %cst_37 : f32 to vector<8x128xf32>
    %96 = arith.addf %95, %94 : vector<8x128xf32>
    %97 = arith.mulf %91, %96 : vector<8x128xf32>
    %c0_38 = arith.constant 0 : index
    %c0_39 = arith.constant 0 : index
    %98 = vector.load %arg9[%c0_38, %c0_39] : memref<128x128xbf16, #tpu.memory_space<vmem>>, vector<128x128xbf16>
    %99 = arith.truncf %97 : vector<8x128xf32> to vector<8x128xbf16>
    %cst_40 = arith.constant dense<0.000000e+00> : vector<8x128xf32>
    %100 = tpu.matmul %99, %98, %cst_40 {dimension_numbers = #tpu.dot_dimension_numbers<[1], [0], [0], [1], [0, 0, 1, 1], [], []>} : vector<8x128xbf16>, vector<128x128xbf16>, vector<8x128xf32> -> vector<8x128xf32>
    %101 = vector.extract_strided_slice %0 {offsets = [6, 0], sizes = [1, 128], strides = [1, 1]} : vector<7x128xf32> to vector<1x128xf32>
    %102 = vector.shape_cast %101 : vector<1x128xf32> to vector<128xf32>
    %103 = vector.shape_cast %102 : vector<128xf32> to vector<1x128xf32>
    %104 = vector.broadcast %103 : vector<1x128xf32> to vector<8x128xf32>
    %105 = arith.addf %100, %104 : vector<8x128xf32>
    %c0_41 = arith.constant 0 : index
    %c0_42 = arith.constant 0 : index
    %106 = vector.load %arg10[%c0_41, %c0_42] : memref<8x128xf32, #tpu.memory_space<vmem>>, vector<8x128xf32>
    tpu.vector_store %arg10[%c0_41, %c0_42], %105 {strides = array<i32>} : memref<8x128xf32, #tpu.memory_space<vmem>>, vector<8x128xf32>,
    return
  }
  func.func @transform_0(%arg0: i32) -> (i32, i32) {
    %c0_i32 = arith.constant 0 : i32
    %c0_i32_0 = arith.constant 0 : i32
    return %arg0, %c0_i32 : i32, i32
  }
  func.func @transform_1(%arg0: i32) -> (i32, i32) {
    %c0_i32 = arith.constant 0 : i32
    %c0_i32_0 = arith.constant 0 : i32
    %c0_i32_1 = arith.constant 0 : i32
    return %c0_i32, %c0_i32_0 : i32, i32
  }
  func.func @transform_2(%arg0: i32) -> (i32, i32) {
    %c0_i32 = arith.constant 0 : i32
    %c0_i32_0 = arith.constant 0 : i32
    %c0_i32_1 = arith.constant 0 : i32
    return %c0_i32, %c0_i32_0 : i32, i32
  }
  func.func @transform_3(%arg0: i32) -> (i32, i32) {
    %c0_i32 = arith.constant 0 : i32
    %c0_i32_0 = arith.constant 0 : i32
    %c0_i32_1 = arith.constant 0 : i32
    return %c0_i32, %c0_i32_0 : i32, i32
  }
  func.func @transform_4(%arg0: i32) -> (i32, i32) {
    %c0_i32 = arith.constant 0 : i32
    %c0_i32_0 = arith.constant 0 : i32
    %c0_i32_1 = arith.constant 0 : i32
    return %c0_i32, %c0_i32_0 : i32, i32
  }
  func.func @transform_5(%arg0: i32) -> (i32, i32) {
    %c0_i32 = arith.constant 0 : i32
    %c0_i32_0 = arith.constant 0 : i32
    %c0_i32_1 = arith.constant 0 : i32
    return %c0_i32, %c0_i32_0 : i32, i32
  }
  func.func @transform_6(%arg0: i32) -> (i32, i32) {
    %c0_i32 = arith.constant 0 : i32
    %c0_i32_0 = arith.constant 0 : i32
    %c0_i32_1 = arith.constant 0 : i32
    return %c0_i32, %c0_i32_0 : i32, i32
  }
  func.func @transform_7(%arg0: i32) -> (i32, i32) {
    %c0_i32 = arith.constant 0 : i32
    %c0_i32_0 = arith.constant 0 : i32
    %c0_i32_1 = arith.constant 0 : i32
    return %c0_i32, %c0_i32_0 : i32, i32
  }
  func.func @transform_8(%arg0: i32) -> (i32, i32) {
    %c0_i32 = arith.constant 0 : i32
    %c0_i32_0 = arith.constant 0 : i32
    %c0_i32_1 = arith.constant 0 : i32
    return %c0_i32, %c0_i32_0 : i32, i32
  }
  func.func @transform_9(%arg0: i32) -> (i32, i32) {
    %c0_i32 = arith.constant 0 : i32
    %c0_i32_0 = arith.constant 0 : i32
    return %arg0, %c0_i32 : i32, i32
  }
}

</mosaic_0001>

<llo_original>
// kernel: tpu_custom_call.1
$region0: #{tpu_custom_call.1}
  #allocation0 [shape = 'u32[]', space=smem, size = 0x4, offset = 0x4, fixed_abs, tag = 'smem constant byte address 0x4 - core index']
  #allocation1 [shape = 'u32[144,128]{1,0:T(1,128)}', space=vmem, size = 0x12000, scoped, tag = 'internal scratch']
  %s0 = inlined_call_operand.hbm [shape: f32[16,128], index: 0, kind: input, shape index: {}]
  %s1 = inlined_call_operand.hbm [shape: f32[7,128], index: 1, kind: input, shape index: {}]
  %s2 = inlined_call_operand.hbm [shape: bf16[128,128], index: 2, kind: input, shape index: {}]
  %s3 = inlined_call_operand.hbm [shape: bf16[128,128], index: 3, kind: input, shape index: {}]
  %s4 = inlined_call_operand.hbm [shape: bf16[128,128], index: 4, kind: input, shape index: {}]
  %s5 = inlined_call_operand.hbm [shape: bf16[128,128], index: 5, kind: input, shape index: {}]
  %s6 = inlined_call_operand.hbm [shape: bf16[128,128], index: 6, kind: input, shape index: {}]
  %s7 = inlined_call_operand.hbm [shape: bf16[128,128], index: 7, kind: input, shape index: {}]
  %s8 = inlined_call_operand.hbm [shape: bf16[128,128], index: 8, kind: input, shape index: {}]
  %s9 = inlined_call_operand.hbm [shape: f32[16,128], index: 9, kind: output, shape index: {}]
  %s10 = sld [smem:[#allocation0]]
  $region105: #{tpu_custom_call.1} parent=0
    _
  %s12 = ssub.s32 1, %s10
  %s13 = scalar_select 0, %s12, %s10
  $region1: #{tpu_custom_call.1} parent=0
    #allocation2 [shape = 'u8[8192]{0}', space=vmem, size = 0x2000, scoped, tag = 'input window, operand 0']
    #allocation3 [shape = 's32[2]{0}', space=sflag, size = 0x8, scoped, tag = 'scoped memory for tpu_custom_call.1']
    #allocation4 [shape = 's32[2]{0}', space=sflag, size = 0x8, scoped, tag = 'scoped memory for tpu_custom_call.1']
    #allocation5 [shape = 'u8[4096]{0}', space=vmem, size = 0x1000, scoped, tag = 'input window, operand 1, single buffered']
    #allocation6 [shape = 's32[1]{0}', space=sflag, size = 0x4, scoped, tag = 'scoped memory for tpu_custom_call.1']
    #allocation7 [shape = 'u8[32768]{0}', space=vmem, size = 0x8000, scoped, tag = 'input window, operand 2, single buffered']
    #allocation8 [shape = 'u8[32768]{0}', space=vmem, size = 0x8000, scoped, tag = 'input window, operand 3, single buffered']
    #allocation9 [shape = 's32[1]{0}', space=sflag, size = 0x4, scoped, tag = 'scoped memory for tpu_custom_call.1']
    #allocation10 [shape = 'u8[32768]{0}', space=vmem, size = 0x8000, scoped, tag = 'input window, operand 4, single buffered']
    #allocation11 [shape = 'u8[32768]{0}', space=vmem, size = 0x8000, scoped, tag = 'input window, operand 5, single buffered']
    #allocation12 [shape = 's32[1]{0}', space=sflag, size = 0x4, scoped, tag = 'scoped memory for tpu_custom_call.1']
    #allocation13 [shape = 'u8[32768]{0}', space=vmem, size = 0x8000, scoped, tag = 'input window, operand 6, single buffered']
    #allocation14 [shape = 'u8[32768]{0}', space=vmem, size = 0x8000, scoped, tag = 'input window, operand 7, single buffered']
    #allocation15 [shape = 's32[1]{0}', space=sflag, size = 0x4, scoped, tag = 'scoped memory for tpu_custom_call.1']
    #allocation16 [shape = 'u8[32768]{0}', space=vmem, size = 0x8000, scoped, tag = 'input window, operand 8, single buffered']
    #allocation17 [shape = 'u8[8192]{0}', space=vmem, size = 0x2000, scoped, tag = 'output window, operand 0']
    %14 = vsyncpa [#allocation3], 0
    %s15 = scalar_lea.sflag [#allocation3], 1
    %16 = vsyncpa %s15, 0
    %17 = vsyncpa [#allocation6], 0
    %18 = vsyncpa [#allocation9], 0
    %19 = vsyncpa [#allocation12], 0
    %20 = vsyncpa [#allocation15], 0
    %21 = vsyncpa [#allocation4], 0
    %s22 = scalar_lea.sflag [#allocation4], 1
    %23 = vsyncpa %s22, 0
    loop: start=0, step=1, limit=4
    $region2: #{tpu_custom_call.1} parent=1 // loop_pre_header
      _
    $region3: #{tpu_custom_call.1} parent=1 // loop_header
      %s25 = sphi 0, %s29
      %p26 = scmp.ge.s32.totalorder %s25, 4
      %s35 = sphi 0, %s37
      %s38 = sphi 0, %s35
      %s39 = sphi 0, %s38
      %s55 = sphi 0, %s39
      %s59 = sphi 0, %s59
      %s61 = sphi 0, %s59
      %s62 = sphi 0, %s61
      %s76 = sphi 0, %s62
      %s80 = sphi 0, %s80
      %s82 = sphi 0, %s80
      %s83 = sphi 0, %s82
      %s97 = sphi 0, %s83
      %s101 = sphi 0, %s101
      %s103 = sphi 0, %s101
      %s104 = sphi 0, %s103
      %s118 = sphi 0, %s104
      %s122 = sphi 0, %s122
      %s124 = sphi 0, %s122
      %s125 = sphi 0, %s124
      %s139 = sphi 0, %s125
      %s143 = sphi 0, %s143
      %s145 = sphi 0, %s143
      %s146 = sphi 0, %s145
      %s160 = sphi 0, %s146
      %s164 = sphi 0, %s164
      %s166 = sphi 0, %s164
      %s167 = sphi 0, %s166
      %s181 = sphi 0, %s167
      %s185 = sphi 0, %s185
      %s187 = sphi 0, %s185
      %s188 = sphi 0, %s187
      %s202 = sphi 0, %s188
      %s206 = sphi 0, %s206
      %s208 = sphi 0, %s206
      %s209 = sphi 0, %s208
      %s223 = sphi 0, %s209
      %s229 = sphi 0, %s231
      %s232 = sphi 0, %s229
      %s233 = sphi 0, %s232
      %s249 = sphi 0, %s233
    $region4: #{tpu_custom_call.1} parent=1 // loop_header_branch
      %28 = sbr.rel (%p26) target = $region8
    $region5: #{tpu_custom_call.1} parent=1 // loop_body
      %s30 = ssub.s32 %s25, 1
      %s31 = ssub.s32 %s25, 2
      %s32 = sadd.s32 %s25, 1
      %s33 = ssub.s32 %s25, %s32
      %p34 = scmp.eq.s32.totalorder %s33, 0
      %s36 = sadd.s32 %s35, 1
      %s37 = scalar_select %p34, %s35, %s36
      %p40 = pneg %p34
      %p41 = scmp.eq.s32.totalorder %s25, 1
      %p42 = por %p40, %p41
      %p43 = scmp.ne.s32.totalorder %s35, %s38
      %p44 = scmp.eq.s32.totalorder %s25, 0
      %p45 = por %p43, %p44
      %p46 = scmp.ne.s32.totalorder %s35, %s38
      %p47 = scmp.eq.s32.totalorder %s30, 1
      %p48 = por %p46, %p47
      %p49 = scmp.ne.s32.totalorder %s38, %s39
      %p50 = scmp.eq.s32.totalorder %s30, 0
      %p51 = por %p49, %p50
      %p52 = scmp.ne.s32.totalorder %s38, %s39
      %p53 = scmp.eq.s32.totalorder %s31, 1
      %p54 = por %p52, %p53
      %p56 = scmp.ne.s32.totalorder %s39, %s55
      %p57 = scmp.eq.s32.totalorder %s31, 0
      %p58 = por %p56, %p57
      %s60 = sadd.s32 %s59, 1
      %p63 = scmp.eq.s32.totalorder %s25, 1
      %p64 = scmp.ne.s32.totalorder %s59, %s61
      %p65 = scmp.eq.s32.totalorder %s25, 0
      %p66 = por %p64, %p65
      %p67 = scmp.ne.s32.totalorder %s59, %s61
      %p68 = scmp.eq.s32.totalorder %s30, 1
      %p69 = por %p67, %p68
      %p70 = scmp.ne.s32.totalorder %s61, %s62
      %p71 = scmp.eq.s32.totalorder %s30, 0
      %p72 = por %p70, %p71
      %p73 = scmp.ne.s32.totalorder %s61, %s62
      %p74 = scmp.eq.s32.totalorder %s31, 1
      %p75 = por %p73, %p74
      %p77 = scmp.ne.s32.totalorder %s62, %s76
      %p78 = scmp.eq.s32.totalorder %s31, 0
      %p79 = por %p77, %p78
      %s81 = sadd.s32 %s80, 1
      %p84 = scmp.eq.s32.totalorder %s25, 1
      %p85 = scmp.ne.s32.totalorder %s80, %s82
      %p86 = scmp.eq.s32.totalorder %s25, 0
      %p87 = por %p85, %p86
      %p88 = scmp.ne.s32.totalorder %s80, %s82
      %p89 = scmp.eq.s32.totalorder %s30, 1
      %p90 = por %p88, %p89
      %p91 = scmp.ne.s32.totalorder %s82, %s83
      %p92 = scmp.eq.s32.totalorder %s30, 0
      %p93 = por %p91, %p92
      %p94 = scmp.ne.s32.totalorder %s82, %s83
      %p95 = scmp.eq.s32.totalorder %s31, 1
      %p96 = por %p94, %p95
      %p98 = scmp.ne.s32.totalorder %s83, %s97
      %p99 = scmp.eq.s32.totalorder %s31, 0
      %p100 = por %p98, %p99
      %s102 = sadd.s32 %s101, 1
      %p105 = scmp.eq.s32.totalorder %s25, 1
      %p106 = scmp.ne.s32.totalorder %s101, %s103
      %p107 = scmp.eq.s32.totalorder %s25, 0
      %p108 = por %p106, %p107
      %p109 = scmp.ne.s32.totalorder %s101, %s103
      %p110 = scmp.eq.s32.totalorder %s30, 1
      %p111 = por %p109, %p110
      %p112 = scmp.ne.s32.totalorder %s103, %s104
      %p113 = scmp.eq.s32.totalorder %s30, 0
      %p114 = por %p112, %p113
      %p115 = scmp.ne.s32.totalorder %s103, %s104
      %p116 = scmp.eq.s32.totalorder %s31, 1
      %p117 = por %p115, %p116
      %p119 = scmp.ne.s32.totalorder %s104, %s118
      %p120 = scmp.eq.s32.totalorder %s31, 0
      %p121 = por %p119, %p120
      %s123 = sadd.s32 %s122, 1
      %p126 = scmp.eq.s32.totalorder %s25, 1
      %p127 = scmp.ne.s32.totalorder %s122, %s124
      %p128 = scmp.eq.s32.totalorder %s25, 0
      %p129 = por %p127, %p128
      %p130 = scmp.ne.s32.totalorder %s122, %s124
      %p131 = scmp.eq.s32.totalorder %s30, 1
      %p132 = por %p130, %p131
      %p133 = scmp.ne.s32.totalorder %s124, %s125
      %p134 = scmp.eq.s32.totalorder %s30, 0
      %p135 = por %p133, %p134
      %p136 = scmp.ne.s32.totalorder %s124, %s125
      %p137 = scmp.eq.s32.totalorder %s31, 1
      %p138 = por %p136, %p137
      %p140 = scmp.ne.s32.totalorder %s125, %s139
      %p141 = scmp.eq.s32.totalorder %s31, 0
      %p142 = por %p140, %p141
      %s144 = sadd.s32 %s143, 1
      %p147 = scmp.eq.s32.totalorder %s25, 1
      %p148 = scmp.ne.s32.totalorder %s143, %s145
      %p149 = scmp.eq.s32.totalorder %s25, 0
      %p150 = por %p148, %p149
      %p151 = scmp.ne.s32.totalorder %s143, %s145
      %p152 = scmp.eq.s32.totalorder %s30, 1
      %p153 = por %p151, %p152
      %p154 = scmp.ne.s32.totalorder %s145, %s146
      %p155 = scmp.eq.s32.totalorder %s30, 0
      %p156 = por %p154, %p155
      %p157 = scmp.ne.s32.totalorder %s145, %s146
      %p158 = scmp.eq.s32.totalorder %s31, 1
      %p159 = por %p157, %p158
      %p161 = scmp.ne.s32.totalorder %s146, %s160
      %p162 = scmp.eq.s32.totalorder %s31, 0
      %p163 = por %p161, %p162
      %s165 = sadd.s32 %s164, 1
      %p168 = scmp.eq.s32.totalorder %s25, 1
      %p169 = scmp.ne.s32.totalorder %s164, %s166
      %p170 = scmp.eq.s32.totalorder %s25, 0
      %p171 = por %p169, %p170
      %p172 = scmp.ne.s32.totalorder %s164, %s166
      %p173 = scmp.eq.s32.totalorder %s30, 1
      %p174 = por %p172, %p173
      %p175 = scmp.ne.s32.totalorder %s166, %s167
      %p176 = scmp.eq.s32.totalorder %s30, 0
      %p177 = por %p175, %p176
      %p178 = scmp.ne.s32.totalorder %s166, %s167
      %p179 = scmp.eq.s32.totalorder %s31, 1
      %p180 = por %p178, %p179
      %p182 = scmp.ne.s32.totalorder %s167, %s181
      %p183 = scmp.eq.s32.totalorder %s31, 0
      %p184 = por %p182, %p183
      %s186 = sadd.s32 %s185, 1
      %p189 = scmp.eq.s32.totalorder %s25, 1
      %p190 = scmp.ne.s32.totalorder %s185, %s187
      %p191 = scmp.eq.s32.totalorder %s25, 0
      %p192 = por %p190, %p191
      %p193 = scmp.ne.s32.totalorder %s185, %s187
      %p194 = scmp.eq.s32.totalorder %s30, 1
      %p195 = por %p193, %p194
      %p196 = scmp.ne.s32.totalorder %s187, %s188
      %p197 = scmp.eq.s32.totalorder %s30, 0
      %p198 = por %p196, %p197
      %p199 = scmp.ne.s32.totalorder %s187, %s188
      %p200 = scmp.eq.s32.totalorder %s31, 1
      %p201 = por %p199, %p200
      %p203 = scmp.ne.s32.totalorder %s188, %s202
      %p204 = scmp.eq.s32.totalorder %s31, 0
      %p205 = por %p203, %p204
      %s207 = sadd.s32 %s206, 1
      %p210 = scmp.eq.s32.totalorder %s25, 1
      %p211 = scmp.ne.s32.totalorder %s206, %s208
      %p212 = scmp.eq.s32.totalorder %s25, 0
      %p213 = por %p211, %p212
      %p214 = scmp.ne.s32.totalorder %s206, %s208
      %p215 = scmp.eq.s32.totalorder %s30, 1
      %p216 = por %p214, %p215
      %p217 = scmp.ne.s32.totalorder %s208, %s209
      %p218 = scmp.eq.s32.totalorder %s30, 0
      %p219 = por %p217, %p218
      %p220 = scmp.ne.s32.totalorder %s208, %s209
      %p221 = scmp.eq.s32.totalorder %s31, 1
      %p222 = por %p220, %p221
      %p224 = scmp.ne.s32.totalorder %s209, %s223
      %p225 = scmp.eq.s32.totalorder %s31, 0
      %p226 = por %p224, %p225
      %s227 = ssub.s32 %s25, %s32
      %p228 = scmp.eq.s32.totalorder %s227, 0
      %s230 = sadd.s32 %s229, 1
      %s231 = scalar_select %p228, %s229, %s230
      %p234 = pneg %p228
      %p235 = scmp.eq.s32.totalorder %s25, 1
      %p236 = por %p234, %p235
      %p237 = scmp.ne.s32.totalorder %s229, %s232
      %p238 = scmp.eq.s32.totalorder %s25, 0
      %p239 = por %p237, %p238
      %p240 = scmp.ne.s32.totalorder %s229, %s232
      %p241 = scmp.eq.s32.totalorder %s30, 1
      %p242 = por %p240, %p241
      %p243 = scmp.ne.s32.totalorder %s232, %s233
      %p244 = scmp.eq.s32.totalorder %s30, 0
      %p245 = por %p243, %p244
      %p246 = scmp.ne.s32.totalorder %s232, %s233
      %p247 = scmp.eq.s32.totalorder %s31, 1
      %p248 = por %p246, %p247
      %p250 = scmp.ne.s32.totalorder %s233, %s249
      %p251 = scmp.eq.s32.totalorder %s31, 0
      %p252 = por %p250, %p251
      %p253 = scmp.le.s32.totalorder 1, %s25
      %p254 = scmp.lt.s32.totalorder %s25, 3
      %p255 = pnand %p253, %p254
      %p256 = pneg %p255
      // Predicated region
      $region9: #{tpu_custom_call.1} parent=5 // pred_check
        _
      $region10: #{tpu_custom_call.1} parent=5 // pred_check_branch
        %258 = sbr.rel (%p255) target = $region12
      $region11: #{tpu_custom_call.1} parent=5 // pred_region
        %s259 = ssub.s32 %s25, 1
        // Predicated region
        $region13: #{tpu_custom_call.1} parent=11 // pred_check
          %p260 = pneg %p72
        $region14: #{tpu_custom_call.1} parent=11 // pred_check_branch
          %262 = sbr.rel (%p260) target = $region16
        $region15: #{tpu_custom_call.1} parent=11 // pred_region
          %s264 = ssub.s32 128, 128
          %265 = vsyncadd [#allocation6], %s264
          %s267 = sshll.u32 [#allocation5], 4
          %s268 = int_to_ptr.vmem [resolvable:$true] %s267
          %270 = dma.hbm_to_vmem [thread:$0]  %s1, 128, %s268, [#allocation6]
        $region16: #{tpu_custom_call.1} parent=11 // pred_fallthru
          _
        // Predicated region
        $region17: #{tpu_custom_call.1} parent=11 // pred_check
          %p271 = pneg %p93
        $region18: #{tpu_custom_call.1} parent=11 // pred_check_branch
          %273 = sbr.rel (%p271) target = $region20
        $region19: #{tpu_custom_call.1} parent=11 // pred_region
          %s275 = ssub.s32 1024, 1024
          %276 = vsyncadd [#allocation6], %s275
          %s277 = sshll.u32 [#allocation7], 4
          %s278 = int_to_ptr.vmem [resolvable:$true] %s277
          %283 = dma.hbm_to_vmem [thread:$0]  %s2, 1024, %s278, [#allocation6], 64, 64, 4
        $region20: #{tpu_custom_call.1} parent=11 // pred_fallthru
          _
        // Predicated region
        $region21: #{tpu_custom_call.1} parent=11 // pred_check
          %p284 = pneg %p114
        $region22: #{tpu_custom_call.1} parent=11 // pred_check_branch
          %286 = sbr.rel (%p284) target = $region24
        $region23: #{tpu_custom_call.1} parent=11 // pred_region
          %s288 = ssub.s32 1024, 1024
          %289 = vsyncadd [#allocation9], %s288
          %s290 = sshll.u32 [#allocation8], 4
          %s291 = int_to_ptr.vmem [resolvable:$true] %s290
          %296 = dma.hbm_to_vmem [thread:$0]  %s3, 1024, %s291, [#allocation9], 64, 64, 4
        $region24: #{tpu_custom_call.1} parent=11 // pred_fallthru
          _
        // Predicated region
        $region25: #{tpu_custom_call.1} parent=11 // pred_check
          %p297 = pneg %p135
        $region26: #{tpu_custom_call.1} parent=11 // pred_check_branch
          %299 = sbr.rel (%p297) target = $region28
        $region27: #{tpu_custom_call.1} parent=11 // pred_region
          %s301 = ssub.s32 1024, 1024
          %302 = vsyncadd [#allocation9], %s301
          %s303 = sshll.u32 [#allocation10], 4
          %s304 = int_to_ptr.vmem [resolvable:$true] %s303
          %309 = dma.hbm_to_vmem [thread:$0]  %s4, 1024, %s304, [#allocation9], 64, 64, 4
        $region28: #{tpu_custom_call.1} parent=11 // pred_fallthru
          _
        // Predicated region
        $region29: #{tpu_custom_call.1} parent=11 // pred_check
          %p310 = pneg %p156
        $region30: #{tpu_custom_call.1} parent=11 // pred_check_branch
          %312 = sbr.rel (%p310) target = $region32
        $region31: #{tpu_custom_call.1} parent=11 // pred_region
          %s314 = ssub.s32 1024, 1024
          %315 = vsyncadd [#allocation12], %s314
          %s316 = sshll.u32 [#allocation11], 4
          %s317 = int_to_ptr.vmem [resolvable:$true] %s316
          %322 = dma.hbm_to_vmem [thread:$0]  %s5, 1024, %s317, [#allocation12], 64, 64, 4
        $region32: #{tpu_custom_call.1} parent=11 // pred_fallthru
          _
        // Predicated region
        $region33: #{tpu_custom_call.1} parent=11 // pred_check
          %p323 = pneg %p177
        $region34: #{tpu_custom_call.1} parent=11 // pred_check_branch
          %325 = sbr.rel (%p323) target = $region36
        $region35: #{tpu_custom_call.1} parent=11 // pred_region
          %s327 = ssub.s32 1024, 1024
          %328 = vsyncadd [#allocation12], %s327
          %s329 = sshll.u32 [#allocation13], 4
          %s330 = int_to_ptr.vmem [resolvable:$true] %s329
          %335 = dma.hbm_to_vmem [thread:$0]  %s6, 1024, %s330, [#allocation12], 64, 64, 4
        $region36: #{tpu_custom_call.1} parent=11 // pred_fallthru
          _
        // Predicated region
        $region37: #{tpu_custom_call.1} parent=11 // pred_check
          %p336 = pneg %p198
        $region38: #{tpu_custom_call.1} parent=11 // pred_check_branch
          %338 = sbr.rel (%p336) target = $region40
        $region39: #{tpu_custom_call.1} parent=11 // pred_region
          %s340 = ssub.s32 1024, 1024
          %341 = vsyncadd [#allocation15], %s340
          %s342 = sshll.u32 [#allocation14], 4
          %s343 = int_to_ptr.vmem [resolvable:$true] %s342
          %348 = dma.hbm_to_vmem [thread:$0]  %s7, 1024, %s343, [#allocation15], 64, 64, 4
        $region40: #{tpu_custom_call.1} parent=11 // pred_fallthru
          _
        // Predicated region
        $region41: #{tpu_custom_call.1} parent=11 // pred_check
          %p349 = pneg %p219
        $region42: #{tpu_custom_call.1} parent=11 // pred_check_branch
          %351 = sbr.rel (%p349) target = $region44
        $region43: #{tpu_custom_call.1} parent=11 // pred_region
          %s353 = ssub.s32 1024, 1024
          %354 = vsyncadd [#allocation15], %s353
          %s355 = sshll.u32 [#allocation16], 4
          %s356 = int_to_ptr.vmem [resolvable:$true] %s355
          %361 = dma.hbm_to_vmem [thread:$0]  %s8, 1024, %s356, [#allocation15], 64, 64, 4
        $region44: #{tpu_custom_call.1} parent=11 // pred_fallthru
          _
      $region12: #{tpu_custom_call.1} parent=5 // pred_fallthru
        _
      %p362 = scmp.lt.s32.totalorder %s25, 2
      // Predicated region
      $region45: #{tpu_custom_call.1} parent=5 // pred_check
        %p363 = pneg %p362
      $region46: #{tpu_custom_call.1} parent=5 // pred_check_branch
        %365 = sbr.rel (%p363) target = $region48
      $region47: #{tpu_custom_call.1} parent=5 // pred_region
        // Predicated region
        $region49: #{tpu_custom_call.1} parent=47 // pred_check
          %p366 = pneg %p45
        $region50: #{tpu_custom_call.1} parent=47 // pred_check_branch
          %368 = sbr.rel (%p366) target = $region52
        $region51: #{tpu_custom_call.1} parent=47 // pred_region
          %s369 = sand.u32 %s35, 1
          %s370 = scalar_lea.sflag [#allocation3], %s369
          %s371 = sand.u32 %s35, 1
          %s372 = smul.addr %s371, 8
          %s373 = scalar_lea.vmem [#allocation2], %s372
          %s375 = ssub.s32 128, 128
          %376 = vsyncadd %s370, %s375
          %s377 = smul.addr %s25, 128
          %s378 = scalar_lea.hbm %s0, %s377
          %s380 = sshll.u32 %s373, 4
          %s381 = int_to_ptr.vmem [resolvable:$true] %s380
          %383 = dma.hbm_to_vmem [thread:$0]  %s378, 128, %s381, %s370
        $region52: #{tpu_custom_call.1} parent=47 // pred_fallthru
          _
      $region48: #{tpu_custom_call.1} parent=5 // pred_fallthru
        _
      %p384 = scmp.le.s32.totalorder 1, %s25
      %p385 = scmp.lt.s32.totalorder %s25, 3
      %p386 = pnand %p384, %p385
      %p387 = pneg %p386
      // Predicated region
      $region53: #{tpu_custom_call.1} parent=5 // pred_check
        _
      $region54: #{tpu_custom_call.1} parent=5 // pred_check_branch
        %389 = sbr.rel (%p386) target = $region56
      $region55: #{tpu_custom_call.1} parent=5 // pred_region
        %s390 = ssub.s32 %s25, 1
        %s391 = sand.u32 %s38, 1
        %s392 = scalar_lea.sflag [#allocation3], %s391
        %s393 = sand.u32 %s38, 1
        %s394 = smul.addr %s393, 8
        %s395 = scalar_lea.vmem [#allocation2], %s394
        // Predicated region
        $region57: #{tpu_custom_call.1} parent=55 // pred_check
          %p396 = pneg %p51
        $region58: #{tpu_custom_call.1} parent=55 // pred_check_branch
          %398 = sbr.rel (%p396) target = $region60
        $region59: #{tpu_custom_call.1} parent=55 // pred_region
          %399 = dma.done %s392, 128
        $region60: #{tpu_custom_call.1} parent=55 // pred_fallthru
          _
        // Predicated region
        $region61: #{tpu_custom_call.1} parent=55 // pred_check
          %p400 = pneg %p72
        $region62: #{tpu_custom_call.1} parent=55 // pred_check_branch
          %402 = sbr.rel (%p400) target = $region64
        $region63: #{tpu_custom_call.1} parent=55 // pred_region
          %403 = dma.done [#allocation6], 128
        $region64: #{tpu_custom_call.1} parent=55 // pred_fallthru
          _
        // Predicated region
        $region65: #{tpu_custom_call.1} parent=55 // pred_check
          %p404 = pneg %p93
        $region66: #{tpu_custom_call.1} parent=55 // pred_check_branch
          %406 = sbr.rel (%p404) target = $region68
        $region67: #{tpu_custom_call.1} parent=55 // pred_region
          %407 = dma.done [#allocation6], 1024
        $region68: #{tpu_custom_call.1} parent=55 // pred_fallthru
          _
        // Predicated region
        $region69: #{tpu_custom_call.1} parent=55 // pred_check
          %p408 = pneg %p114
        $region70: #{tpu_custom_call.1} parent=55 // pred_check_branch
          %410 = sbr.rel (%p408) target = $region72
        $region71: #{tpu_custom_call.1} parent=55 // pred_region
          %411 = dma.done [#allocation9], 1024
        $region72: #{tpu_custom_call.1} parent=55 // pred_fallthru
          _
        // Predicated region
        $region73: #{tpu_custom_call.1} parent=55 // pred_check
          %p412 = pneg %p135
        $region74: #{tpu_custom_call.1} parent=55 // pred_check_branch
          %414 = sbr.rel (%p412) target = $region76
        $region75: #{tpu_custom_call.1} parent=55 // pred_region
          %415 = dma.done [#allocation9], 1024
        $region76: #{tpu_custom_call.1} parent=55 // pred_fallthru
          _
        // Predicated region
        $region77: #{tpu_custom_call.1} parent=55 // pred_check
          %p416 = pneg %p156
        $region78: #{tpu_custom_call.1} parent=55 // pred_check_branch
          %418 = sbr.rel (%p416) target = $region80
        $region79: #{tpu_custom_call.1} parent=55 // pred_region
          %419 = dma.done [#allocation12], 1024
        $region80: #{tpu_custom_call.1} parent=55 // pred_fallthru
          _
        // Predicated region
        $region81: #{tpu_custom_call.1} parent=55 // pred_check
          %p420 = pneg %p177
        $region82: #{tpu_custom_call.1} parent=55 // pred_check_branch
          %422 = sbr.rel (%p420) target = $region84
        $region83: #{tpu_custom_call.1} parent=55 // pred_region
          %423 = dma.done [#allocation12], 1024
        $region84: #{tpu_custom_call.1} parent=55 // pred_fallthru
          _
        // Predicated region
        $region85: #{tpu_custom_call.1} parent=55 // pred_check
          %p424 = pneg %p198
        $region86: #{tpu_custom_call.1} parent=55 // pred_check_branch
          %426 = sbr.rel (%p424) target = $region88
        $region87: #{tpu_custom_call.1} parent=55 // pred_region
          %427 = dma.done [#allocation15], 1024
        $region88: #{tpu_custom_call.1} parent=55 // pred_fallthru
          _
        // Predicated region
        $region89: #{tpu_custom_call.1} parent=55 // pred_check
          %p428 = pneg %p219
        $region90: #{tpu_custom_call.1} parent=55 // pred_check_branch
          %430 = sbr.rel (%p428) target = $region92
        $region91: #{tpu_custom_call.1} parent=55 // pred_region
          %431 = dma.done [#allocation15], 1024
        $region92: #{tpu_custom_call.1} parent=55 // pred_fallthru
          _
        %s432 = sand.u32 %s38, 1
        %s433 = scalar_lea.sflag [#allocation3], %s432
        %s434 = sand.u32 %s38, 1
        %s435 = smul.addr %s434, 8
        %s436 = scalar_lea.vmem [#allocation2], %s435
        %p437 = pneg %p51
        %p438 = pneg %p48
        %p439 = pneg %p72
        %p440 = pneg %p69
        %p441 = pneg %p93
        %p442 = pneg %p90
        %p443 = pneg %p114
        %p444 = pneg %p111
        %p445 = pneg %p135
        %p446 = pneg %p132
        %p447 = pneg %p156
        %p448 = pneg %p153
        %p449 = pneg %p177
        %p450 = pneg %p174
        %p451 = pneg %p198
        %p452 = pneg %p195
        %p453 = pneg %p219
        %p454 = pneg %p216
        %p455 = pneg %p245
        %p456 = pneg %p242
        %s457 = sand.u32 %s232, 1
        %s458 = scalar_lea.sflag [#allocation4], %s457
        %s459 = sand.u32 %s232, 1
        %s460 = smul.addr %s459, 8
        %s461 = scalar_lea.vmem [#allocation17], %s460
        %v463 = vld [vmem:[#allocation5] sm:$0x7f]
        %v464 = vld [vmem:[%s395] sm:$0xff]
        %v465 = vld [vmem:[#allocation7] sm:$0xf]
        %v466 = vld [vmem:[#allocation7 + $0x4] sm:$0xf]
        %v467 = vld [vmem:[#allocation7 + $0x8] sm:$0xf]
        %v468 = vld [vmem:[#allocation7 + $0xc] sm:$0xf]
        %v469 = vld [vmem:[#allocation7 + $0x10] sm:$0xf]
        %v470 = vld [vmem:[#allocation7 + $0x14] sm:$0xf]
        %v471 = vld [vmem:[#allocation7 + $0x18] sm:$0xf]
        %v472 = vld [vmem:[#allocation7 + $0x1c] sm:$0xf]
        %v473 = vld [vmem:[#allocation7 + $0x20] sm:$0xf]
        %v474 = vld [vmem:[#allocation7 + $0x24] sm:$0xf]
        %v475 = vld [vmem:[#allocation7 + $0x28] sm:$0xf]
        %v476 = vld [vmem:[#allocation7 + $0x2c] sm:$0xf]
        %v477 = vld [vmem:[#allocation7 + $0x30] sm:$0xf]
        %v478 = vld [vmem:[#allocation7 + $0x34] sm:$0xf]
        %v479 = vld [vmem:[#allocation7 + $0x38] sm:$0xf]
        %v480 = vld [vmem:[#allocation7 + $0x3c] sm:$0xf]
        %v481 = vpack.c.bf16 %v464, %v464
        %v482 = vlaneseq
        %v483 = vshrl.u32 %v482, 7
        %v484 = vsub.s32 0, %v483
        %v485 = vrot.slane %v463, %v484
        %v502 = vunpack.c.l.b16 %v465
        %v503 = vunpack.c.l.b16 %v466
        %v504 = vunpack.c.l.b16 %v467
        %v505 = vunpack.c.l.b16 %v468
        %v506 = vunpack.c.l.b16 %v469
        %v507 = vunpack.c.l.b16 %v470
        %v508 = vunpack.c.l.b16 %v471
        %v509 = vunpack.c.l.b16 %v472
        %v510 = vunpack.c.l.b16 %v473
        %v511 = vunpack.c.l.b16 %v474
        %v512 = vunpack.c.l.b16 %v475
        %v513 = vunpack.c.l.b16 %v476
        %v514 = vunpack.c.l.b16 %v477
        %v515 = vunpack.c.l.b16 %v478
        %v516 = vunpack.c.l.b16 %v479
        %v517 = vunpack.c.l.b16 %v480
        %v518 = vpack.c.b16 %v503, %v502
        %v519 = vpack.c.b16 %v505, %v504
        %v520 = vpack.c.b16 %v507, %v506
        %v521 = vpack.c.b16 %v509, %v508
        %v522 = vpack.c.b16 %v511, %v510
        %v523 = vpack.c.b16 %v513, %v512
        %v524 = vpack.c.b16 %v515, %v514
        %v525 = vpack.c.b16 %v517, %v516
        %534 = vmatprep.subr.bf16.mxu0 0
        %535 = vmatpush1.bf16.msra.mxu0 %v525
        %536 = vmatprep.subr.bf16.mxu0 0
        %537 = vmatpush1.bf16.msra.mxu0 %v524
        %538 = vmatprep.subr.bf16.mxu0 0
        %539 = vmatpush1.bf16.msra.mxu0 %v523
        %540 = vmatprep.subr.bf16.mxu0 0
        %541 = vmatpush1.bf16.msra.mxu0 %v522
        %542 = vmatprep.subr.bf16.mxu0 0
        %543 = vmatpush1.bf16.msra.mxu0 %v521
        %544 = vmatprep.subr.bf16.mxu0 0
        %545 = vmatpush1.bf16.msra.mxu0 %v520
        %546 = vmatprep.subr.bf16.mxu0 0
        %547 = vmatpush1.bf16.msra.mxu0 %v519
        %548 = vmatprep.subr.bf16.mxu0 0
        %549 = vmatpush1.bf16.msra.mxu0 %v518
        %550 = vmatprep.subr.bf16.mxu0 0
        %551 = vmatpush2.bf16.msra.mxu0 0
        %552 = vmatprep.subr.bf16.mxu0 0
        %553 = vmatpush2.bf16.msra.mxu0 0
        %554 = vmatprep.subr.bf16.mxu0 0
        %555 = vmatpush2.bf16.msra.mxu0 0
        %556 = vmatprep.subr.bf16.mxu0 0
        %557 = vmatpush2.bf16.msra.mxu0 0
        %558 = vmatprep.subr.bf16.mxu0 0
        %559 = vmatpush2.bf16.msra.mxu0 0
        %560 = vmatprep.subr.bf16.mxu0 0
        %561 = vmatpush2.bf16.msra.mxu0 0
        %562 = vmatprep.subr.bf16.mxu0 0
        %563 = vmatpush2.bf16.msra.mxu0 0
        %564 = vmatprep.subr.bf16.mxu0 0
        %565 = vmatpush2.bf16.msra.mxu0 0
        %566 = vmatprep.mubr.bf16.mxu0 0
        %567 = vmatmul.mubr.bf16.gmra.mxu0 %v481
        %v568 = vpop.f32.mrf.mxu0
        %v569 = vadd.f32 %v485, %v568
        %v570 = vpop.f32.mrf.mxu0
        %v571 = vpop.f32.mrf.mxu0
        %v572 = vpop.f32.mrf.mxu0
        %573 = vdwg.mxu0
        %v574 = vmul.f32 %v569, 0.5
        %v575 = vmul.f32 %v569, 0.70710677
        %v576 = verf.f32.pop %v575
        %v577 = vadd.f32 %v576, 1.0
        %v578 = vmul.f32 %v574, %v577
        %v579 = vld [vmem:[#allocation8] sm:$0xf]
        %v580 = vld [vmem:[#allocation8 + $0x4] sm:$0xf]
        %v581 = vld [vmem:[#allocation8 + $0x8] sm:$0xf]
        %v582 = vld [vmem:[#allocation8 + $0xc] sm:$0xf]
        %v583 = vld [vmem:[#allocation8 + $0x10] sm:$0xf]
        %v584 = vld [vmem:[#allocation8 + $0x14] sm:$0xf]
        %v585 = vld [vmem:[#allocation8 + $0x18] sm:$0xf]
        %v586 = vld [vmem:[#allocation8 + $0x1c] sm:$0xf]
        %v587 = vld [vmem:[#allocation8 + $0x20] sm:$0xf]
        %v588 = vld [vmem:[#allocation8 + $0x24] sm:$0xf]
        %v589 = vld [vmem:[#allocation8 + $0x28] sm:$0xf]
        %v590 = vld [vmem:[#allocation8 + $0x2c] sm:$0xf]
        %v591 = vld [vmem:[#allocation8 + $0x30] sm:$0xf]
        %v592 = vld [vmem:[#allocation8 + $0x34] sm:$0xf]
        %v593 = vld [vmem:[#allocation8 + $0x38] sm:$0xf]
        %v594 = vld [vmem:[#allocation8 + $0x3c] sm:$0xf]
        %v595 = vpack.c.bf16 %v578, %v578
        %v596 = vlaneseq
        %v597 = vshrl.u32 %v596, 7
        %v598 = vsub.s32 1, %v597
        %v599 = vrot.slane %v463, %v598
        %v616 = vunpack.c.l.b16 %v579
        %v617 = vunpack.c.l.b16 %v580
        %v618 = vunpack.c.l.b16 %v581
        %v619 = vunpack.c.l.b16 %v582
        %v620 = vunpack.c.l.b16 %v583
        %v621 = vunpack.c.l.b16 %v584
        %v622 = vunpack.c.l.b16 %v585
        %v623 = vunpack.c.l.b16 %v586
        %v624 = vunpack.c.l.b16 %v587
        %v625 = vunpack.c.l.b16 %v588
        %v626 = vunpack.c.l.b16 %v589
        %v627 = vunpack.c.l.b16 %v590
        %v628 = vunpack.c.l.b16 %v591
        %v629 = vunpack.c.l.b16 %v592
        %v630 = vunpack.c.l.b16 %v593
        %v631 = vunpack.c.l.b16 %v594
        %v632 = vpack.c.b16 %v617, %v616
        %v633 = vpack.c.b16 %v619, %v618
        %v634 = vpack.c.b16 %v621, %v620
        %v635 = vpack.c.b16 %v623, %v622
        %v636 = vpack.c.b16 %v625, %v624
        %v637 = vpack.c.b16 %v627, %v626
        %v638 = vpack.c.b16 %v629, %v628
        %v639 = vpack.c.b16 %v631, %v630
        %648 = vmatprep.subr.bf16.mxu0 0
        %649 = vmatpush1.bf16.msra.mxu0 %v639
        %650 = vmatprep.subr.bf16.mxu0 0
        %651 = vmatpush1.bf16.msra.mxu0 %v638
        %652 = vmatprep.subr.bf16.mxu0 0
        %653 = vmatpush1.bf16.msra.mxu0 %v637
        %654 = vmatprep.subr.bf16.mxu0 0
        %655 = vmatpush1.bf16.msra.mxu0 %v636
        %656 = vmatprep.subr.bf16.mxu0 0
        %657 = vmatpush1.bf16.msra.mxu0 %v635
        %658 = vmatprep.subr.bf16.mxu0 0
        %659 = vmatpush1.bf16.msra.mxu0 %v634
        %660 = vmatprep.subr.bf16.mxu0 0
        %661 = vmatpush1.bf16.msra.mxu0 %v633
        %662 = vmatprep.subr.bf16.mxu0 0
        %663 = vmatpush1.bf16.msra.mxu0 %v632
        %664 = vmatprep.subr.bf16.mxu0 0
        %665 = vmatpush2.bf16.msra.mxu0 0
        %666 = vmatprep.subr.bf16.mxu0 0
        %667 = vmatpush2.bf16.msra.mxu0 0
        %668 = vmatprep.subr.bf16.mxu0 0
        %669 = vmatpush2.bf16.msra.mxu0 0
        %670 = vmatprep.subr.bf16.mxu0 0
        %671 = vmatpush2.bf16.msra.mxu0 0
        %672 = vmatprep.subr.bf16.mxu0 0
        %673 = vmatpush2.bf16.msra.mxu0 0
        %674 = vmatprep.subr.bf16.mxu0 0
        %675 = vmatpush2.bf16.msra.mxu0 0
        %676 = vmatprep.subr.bf16.mxu0 0
        %677 = vmatpush2.bf16.msra.mxu0 0
        %678 = vmatprep.subr.bf16.mxu0 0
        %679 = vmatpush2.bf16.msra.mxu0 0
        %680 = vmatprep.mubr.bf16.mxu0 0
        %681 = vmatmul.mubr.bf16.gmra.mxu0 %v595
        %v682 = vpop.f32.mrf.mxu0
        %v683 = vadd.f32 %v599, %v682
        %v684 = vpop.f32.mrf.mxu0
        %v685 = vpop.f32.mrf.mxu0
        %v686 = vpop.f32.mrf.mxu0
        %687 = vdwg.mxu0
        %v688 = vmul.f32 %v683, 0.5
        %v689 = vmul.f32 %v683, 0.70710677
        %v690 = verf.f32.pop %v689
        %v691 = vadd.f32 %v690, 1.0
        %v692 = vmul.f32 %v688, %v691
        %v693 = vld [vmem:[#allocation10] sm:$0xf]
        %v694 = vld [vmem:[#allocation10 + $0x4] sm:$0xf]
        %v695 = vld [vmem:[#allocation10 + $0x8] sm:$0xf]
        %v696 = vld [vmem:[#allocation10 + $0xc] sm:$0xf]
        %v697 = vld [vmem:[#allocation10 + $0x10] sm:$0xf]
        %v698 = vld [vmem:[#allocation10 + $0x14] sm:$0xf]
        %v699 = vld [vmem:[#allocation10 + $0x18] sm:$0xf]
        %v700 = vld [vmem:[#allocation10 + $0x1c] sm:$0xf]
        %v701 = vld [vmem:[#allocation10 + $0x20] sm:$0xf]
        %v702 = vld [vmem:[#allocation10 + $0x24] sm:$0xf]
        %v703 = vld [vmem:[#allocation10 + $0x28] sm:$0xf]
        %v704 = vld [vmem:[#allocation10 + $0x2c] sm:$0xf]
        %v705 = vld [vmem:[#allocation10 + $0x30] sm:$0xf]
        %v706 = vld [vmem:[#allocation10 + $0x34] sm:$0xf]
        %v707 = vld [vmem:[#allocation10 + $0x38] sm:$0xf]
        %v708 = vld [vmem:[#allocation10 + $0x3c] sm:$0xf]
        %v709 = vpack.c.bf16 %v692, %v692
        %v710 = vlaneseq
        %v711 = vshrl.u32 %v710, 7
        %v712 = vsub.s32 2, %v711
        %v713 = vrot.slane %v463, %v712
        %v730 = vunpack.c.l.b16 %v693
        %v731 = vunpack.c.l.b16 %v694
        %v732 = vunpack.c.l.b16 %v695
        %v733 = vunpack.c.l.b16 %v696
        %v734 = vunpack.c.l.b16 %v697
        %v735 = vunpack.c.l.b16 %v698
        %v736 = vunpack.c.l.b16 %v699
        %v737 = vunpack.c.l.b16 %v700
        %v738 = vunpack.c.l.b16 %v701
        %v739 = vunpack.c.l.b16 %v702
        %v740 = vunpack.c.l.b16 %v703
        %v741 = vunpack.c.l.b16 %v704
        %v742 = vunpack.c.l.b16 %v705
        %v743 = vunpack.c.l.b16 %v706
        %v744 = vunpack.c.l.b16 %v707
        %v745 = vunpack.c.l.b16 %v708
        %v746 = vpack.c.b16 %v731, %v730
        %v747 = vpack.c.b16 %v733, %v732
        %v748 = vpack.c.b16 %v735, %v734
        %v749 = vpack.c.b16 %v737, %v736
        %v750 = vpack.c.b16 %v739, %v738
        %v751 = vpack.c.b16 %v741, %v740
        %v752 = vpack.c.b16 %v743, %v742
        %v753 = vpack.c.b16 %v745, %v744
        %762 = vmatprep.subr.bf16.mxu0 0
        %763 = vmatpush1.bf16.msra.mxu0 %v753
        %764 = vmatprep.subr.bf16.mxu0 0
        %765 = vmatpush1.bf16.msra.mxu0 %v752
        %766 = vmatprep.subr.bf16.mxu0 0
        %767 = vmatpush1.bf16.msra.mxu0 %v751
        %768 = vmatprep.subr.bf16.mxu0 0
        %769 = vmatpush1.bf16.msra.mxu0 %v750
        %770 = vmatprep.subr.bf16.mxu0 0
        %771 = vmatpush1.bf16.msra.mxu0 %v749
        %772 = vmatprep.subr.bf16.mxu0 0
        %773 = vmatpush1.bf16.msra.mxu0 %v748
        %774 = vmatprep.subr.bf16.mxu0 0
        %775 = vmatpush1.bf16.msra.mxu0 %v747
        %776 = vmatprep.subr.bf16.mxu0 0
        %777 = vmatpush1.bf16.msra.mxu0 %v746
        %778 = vmatprep.subr.bf16.mxu0 0
        %779 = vmatpush2.bf16.msra.mxu0 0
        %780 = vmatprep.subr.bf16.mxu0 0
        %781 = vmatpush2.bf16.msra.mxu0 0
        %782 = vmatprep.subr.bf16.mxu0 0
        %783 = vmatpush2.bf16.msra.mxu0 0
        %784 = vmatprep.subr.bf16.mxu0 0
        %785 = vmatpush2.bf16.msra.mxu0 0
        %786 = vmatprep.subr.bf16.mxu0 0
        %787 = vmatpush2.bf16.msra.mxu0 0
        %788 = vmatprep.subr.bf16.mxu0 0
        %789 = vmatpush2.bf16.msra.mxu0 0
        %790 = vmatprep.subr.bf16.mxu0 0
        %791 = vmatpush2.bf16.msra.mxu0 0
        %792 = vmatprep.subr.bf16.mxu0 0
        %793 = vmatpush2.bf16.msra.mxu0 0
        %794 = vmatprep.mubr.bf16.mxu0 0
        %795 = vmatmul.mubr.bf16.gmra.mxu0 %v709
        %v796 = vpop.f32.mrf.mxu0
        %v797 = vadd.f32 %v713, %v796
        %v798 = vpop.f32.mrf.mxu0
        %v799 = vpop.f32.mrf.mxu0
        %v800 = vpop.f32.mrf.mxu0
        %801 = vdwg.mxu0
        %v802 = vmul.f32 %v797, 0.5
        %v803 = vmul.f32 %v797, 0.70710677
        %v804 = verf.f32.pop %v803
        %v805 = vadd.f32 %v804, 1.0
        %v806 = vmul.f32 %v802, %v805
        %v807 = vld [vmem:[#allocation11] sm:$0xf]
        %v808 = vld [vmem:[#allocation11 + $0x4] sm:$0xf]
        %v809 = vld [vmem:[#allocation11 + $0x8] sm:$0xf]
        %v810 = vld [vmem:[#allocation11 + $0xc] sm:$0xf]
        %v811 = vld [vmem:[#allocation11 + $0x10] sm:$0xf]
        %v812 = vld [vmem:[#allocation11 + $0x14] sm:$0xf]
        %v813 = vld [vmem:[#allocation11 + $0x18] sm:$0xf]
        %v814 = vld [vmem:[#allocation11 + $0x1c] sm:$0xf]
        %v815 = vld [vmem:[#allocation11 + $0x20] sm:$0xf]
        %v816 = vld [vmem:[#allocation11 + $0x24] sm:$0xf]
        %v817 = vld [vmem:[#allocation11 + $0x28] sm:$0xf]
        %v818 = vld [vmem:[#allocation11 + $0x2c] sm:$0xf]
        %v819 = vld [vmem:[#allocation11 + $0x30] sm:$0xf]
        %v820 = vld [vmem:[#allocation11 + $0x34] sm:$0xf]
        %v821 = vld [vmem:[#allocation11 + $0x38] sm:$0xf]
        %v822 = vld [vmem:[#allocation11 + $0x3c] sm:$0xf]
        %v823 = vpack.c.bf16 %v806, %v806
        %v824 = vlaneseq
        %v825 = vshrl.u32 %v824, 7
        %v826 = vsub.s32 3, %v825
        %v827 = vrot.slane %v463, %v826
        %v844 = vunpack.c.l.b16 %v807
        %v845 = vunpack.c.l.b16 %v808
        %v846 = vunpack.c.l.b16 %v809
        %v847 = vunpack.c.l.b16 %v810
        %v848 = vunpack.c.l.b16 %v811
        %v849 = vunpack.c.l.b16 %v812
        %v850 = vunpack.c.l.b16 %v813
        %v851 = vunpack.c.l.b16 %v814
        %v852 = vunpack.c.l.b16 %v815
        %v853 = vunpack.c.l.b16 %v816
        %v854 = vunpack.c.l.b16 %v817
        %v855 = vunpack.c.l.b16 %v818
        %v856 = vunpack.c.l.b16 %v819
        %v857 = vunpack.c.l.b16 %v820
        %v858 = vunpack.c.l.b16 %v821
        %v859 = vunpack.c.l.b16 %v822
        %v860 = vpack.c.b16 %v845, %v844
        %v861 = vpack.c.b16 %v847, %v846
        %v862 = vpack.c.b16 %v849, %v848
        %v863 = vpack.c.b16 %v851, %v850
        %v864 = vpack.c.b16 %v853, %v852
        %v865 = vpack.c.b16 %v855, %v854
        %v866 = vpack.c.b16 %v857, %v856
        %v867 = vpack.c.b16 %v859, %v858
        %876 = vmatprep.subr.bf16.mxu0 0
        %877 = vmatpush1.bf16.msra.mxu0 %v867
        %878 = vmatprep.subr.bf16.mxu0 0
        %879 = vmatpush1.bf16.msra.mxu0 %v866
        %880 = vmatprep.subr.bf16.mxu0 0
        %881 = vmatpush1.bf16.msra.mxu0 %v865
        %882 = vmatprep.subr.bf16.mxu0 0
        %883 = vmatpush1.bf16.msra.mxu0 %v864
        %884 = vmatprep.subr.bf16.mxu0 0
        %885 = vmatpush1.bf16.msra.mxu0 %v863
        %886 = vmatprep.subr.bf16.mxu0 0
        %887 = vmatpush1.bf16.msra.mxu0 %v862
        %888 = vmatprep.subr.bf16.mxu0 0
        %889 = vmatpush1.bf16.msra.mxu0 %v861
        %890 = vmatprep.subr.bf16.mxu0 0
        %891 = vmatpush1.bf16.msra.mxu0 %v860
        %892 = vmatprep.subr.bf16.mxu0 0
        %893 = vmatpush2.bf16.msra.mxu0 0
        %894 = vmatprep.subr.bf16.mxu0 0
        %895 = vmatpush2.bf16.msra.mxu0 0
        %896 = vmatprep.subr.bf16.mxu0 0
        %897 = vmatpush2.bf16.msra.mxu0 0
        %898 = vmatprep.subr.bf16.mxu0 0
        %899 = vmatpush2.bf16.msra.mxu0 0
        %900 = vmatprep.subr.bf16.mxu0 0
        %901 = vmatpush2.bf16.msra.mxu0 0
        %902 = vmatprep.subr.bf16.mxu0 0
        %903 = vmatpush2.bf16.msra.mxu0 0
        %904 = vmatprep.subr.bf16.mxu0 0
        %905 = vmatpush2.bf16.msra.mxu0 0
        %906 = vmatprep.subr.bf16.mxu0 0
        %907 = vmatpush2.bf16.msra.mxu0 0
        %908 = vmatprep.mubr.bf16.mxu0 0
        %909 = vmatmul.mubr.bf16.gmra.mxu0 %v823
        %v910 = vpop.f32.mrf.mxu0
        %v911 = vadd.f32 %v827, %v910
        %v912 = vpop.f32.mrf.mxu0
        %v913 = vpop.f32.mrf.mxu0
        %v914 = vpop.f32.mrf.mxu0
        %915 = vdwg.mxu0
        %v916 = vmul.f32 %v911, 0.5
        %v917 = vmul.f32 %v911, 0.70710677
        %v918 = verf.f32.pop %v917
        %v919 = vadd.f32 %v918, 1.0
        %v920 = vmul.f32 %v916, %v919
        %v921 = vld [vmem:[#allocation13] sm:$0xf]
        %v922 = vld [vmem:[#allocation13 + $0x4] sm:$0xf]
        %v923 = vld [vmem:[#allocation13 + $0x8] sm:$0xf]
        %v924 = vld [vmem:[#allocation13 + $0xc] sm:$0xf]
        %v925 = vld [vmem:[#allocation13 + $0x10] sm:$0xf]
        %v926 = vld [vmem:[#allocation13 + $0x14] sm:$0xf]
        %v927 = vld [vmem:[#allocation13 + $0x18] sm:$0xf]
        %v928 = vld [vmem:[#allocation13 + $0x1c] sm:$0xf]
        %v929 = vld [vmem:[#allocation13 + $0x20] sm:$0xf]
        %v930 = vld [vmem:[#allocation13 + $0x24] sm:$0xf]
        %v931 = vld [vmem:[#allocation13 + $0x28] sm:$0xf]
        %v932 = vld [vmem:[#allocation13 + $0x2c] sm:$0xf]
        %v933 = vld [vmem:[#allocation13 + $0x30] sm:$0xf]
        %v934 = vld [vmem:[#allocation13 + $0x34] sm:$0xf]
        %v935 = vld [vmem:[#allocation13 + $0x38] sm:$0xf]
        %v936 = vld [vmem:[#allocation13 + $0x3c] sm:$0xf]
        %v937 = vpack.c.bf16 %v920, %v920
        %v938 = vlaneseq
        %v939 = vshrl.u32 %v938, 7
        %v940 = vsub.s32 4, %v939
        %v941 = vrot.slane %v463, %v940
        %v958 = vunpack.c.l.b16 %v921
        %v959 = vunpack.c.l.b16 %v922
        %v960 = vunpack.c.l.b16 %v923
        %v961 = vunpack.c.l.b16 %v924
        %v962 = vunpack.c.l.b16 %v925
        %v963 = vunpack.c.l.b16 %v926
        %v964 = vunpack.c.l.b16 %v927
        %v965 = vunpack.c.l.b16 %v928
        %v966 = vunpack.c.l.b16 %v929
        %v967 = vunpack.c.l.b16 %v930
        %v968 = vunpack.c.l.b16 %v931
        %v969 = vunpack.c.l.b16 %v932
        %v970 = vunpack.c.l.b16 %v933
        %v971 = vunpack.c.l.b16 %v934
        %v972 = vunpack.c.l.b16 %v935
        %v973 = vunpack.c.l.b16 %v936
        %v974 = vpack.c.b16 %v959, %v958
        %v975 = vpack.c.b16 %v961, %v960
        %v976 = vpack.c.b16 %v963, %v962
        %v977 = vpack.c.b16 %v965, %v964
        %v978 = vpack.c.b16 %v967, %v966
        %v979 = vpack.c.b16 %v969, %v968
        %v980 = vpack.c.b16 %v971, %v970
        %v981 = vpack.c.b16 %v973, %v972
        %990 = vmatprep.subr.bf16.mxu0 0
        %991 = vmatpush1.bf16.msra.mxu0 %v981
        %992 = vmatprep.subr.bf16.mxu0 0
        %993 = vmatpush1.bf16.msra.mxu0 %v980
        %994 = vmatprep.subr.bf16.mxu0 0
        %995 = vmatpush1.bf16.msra.mxu0 %v979
        %996 = vmatprep.subr.bf16.mxu0 0
        %997 = vmatpush1.bf16.msra.mxu0 %v978
        %998 = vmatprep.subr.bf16.mxu0 0
        %999 = vmatpush1.bf16.msra.mxu0 %v977
        %1000 = vmatprep.subr.bf16.mxu0 0
        %1001 = vmatpush1.bf16.msra.mxu0 %v976
        %1002 = vmatprep.subr.bf16.mxu0 0
        %1003 = vmatpush1.bf16.msra.mxu0 %v975
        %1004 = vmatprep.subr.bf16.mxu0 0
        %1005 = vmatpush1.bf16.msra.mxu0 %v974
        %1006 = vmatprep.subr.bf16.mxu0 0
        %1007 = vmatpush2.bf16.msra.mxu0 0
        %1008 = vmatprep.subr.bf16.mxu0 0
        %1009 = vmatpush2.bf16.msra.mxu0 0
        %1010 = vmatprep.subr.bf16.mxu0 0
        %1011 = vmatpush2.bf16.msra.mxu0 0
        %1012 = vmatprep.subr.bf16.mxu0 0
        %1013 = vmatpush2.bf16.msra.mxu0 0
        %1014 = vmatprep.subr.bf16.mxu0 0
        %1015 = vmatpush2.bf16.msra.mxu0 0
        %1016 = vmatprep.subr.bf16.mxu0 0
        %1017 = vmatpush2.bf16.msra.mxu0 0
        %1018 = vmatprep.subr.bf16.mxu0 0
        %1019 = vmatpush2.bf16.msra.mxu0 0
        %1020 = vmatprep.subr.bf16.mxu0 0
        %1021 = vmatpush2.bf16.msra.mxu0 0
        %1022 = vmatprep.mubr.bf16.mxu0 0
        %1023 = vmatmul.mubr.bf16.gmra.mxu0 %v937
        %v1024 = vpop.f32.mrf.mxu0
        %v1025 = vadd.f32 %v941, %v1024
        %v1026 = vpop.f32.mrf.mxu0
        %v1027 = vpop.f32.mrf.mxu0
        %v1028 = vpop.f32.mrf.mxu0
        %1029 = vdwg.mxu0
        %v1030 = vmul.f32 %v1025, 0.5
        %v1031 = vmul.f32 %v1025, 0.70710677
        %v1032 = verf.f32.pop %v1031
        %v1033 = vadd.f32 %v1032, 1.0
        %v1034 = vmul.f32 %v1030, %v1033
        %v1035 = vld [vmem:[#allocation14] sm:$0xf]
        %v1036 = vld [vmem:[#allocation14 + $0x4] sm:$0xf]
        %v1037 = vld [vmem:[#allocation14 + $0x8] sm:$0xf]
        %v1038 = vld [vmem:[#allocation14 + $0xc] sm:$0xf]
        %v1039 = vld [vmem:[#allocation14 + $0x10] sm:$0xf]
        %v1040 = vld [vmem:[#allocation14 + $0x14] sm:$0xf]
        %v1041 = vld [vmem:[#allocation14 + $0x18] sm:$0xf]
        %v1042 = vld [vmem:[#allocation14 + $0x1c] sm:$0xf]
        %v1043 = vld [vmem:[#allocation14 + $0x20] sm:$0xf]
        %v1044 = vld [vmem:[#allocation14 + $0x24] sm:$0xf]
        %v1045 = vld [vmem:[#allocation14 + $0x28] sm:$0xf]
        %v1046 = vld [vmem:[#allocation14 + $0x2c] sm:$0xf]
        %v1047 = vld [vmem:[#allocation14 + $0x30] sm:$0xf]
        %v1048 = vld [vmem:[#allocation14 + $0x34] sm:$0xf]
        %v1049 = vld [vmem:[#allocation14 + $0x38] sm:$0xf]
        %v1050 = vld [vmem:[#allocation14 + $0x3c] sm:$0xf]
        %v1051 = vpack.c.bf16 %v1034, %v1034
        %v1052 = vlaneseq
        %v1053 = vshrl.u32 %v1052, 7
        %v1054 = vsub.s32 5, %v1053
        %v1055 = vrot.slane %v463, %v1054
        %v1072 = vunpack.c.l.b16 %v1035
        %v1073 = vunpack.c.l.b16 %v1036
        %v1074 = vunpack.c.l.b16 %v1037
        %v1075 = vunpack.c.l.b16 %v1038
        %v1076 = vunpack.c.l.b16 %v1039
        %v1077 = vunpack.c.l.b16 %v1040
        %v1078 = vunpack.c.l.b16 %v1041
        %v1079 = vunpack.c.l.b16 %v1042
        %v1080 = vunpack.c.l.b16 %v1043
        %v1081 = vunpack.c.l.b16 %v1044
        %v1082 = vunpack.c.l.b16 %v1045
        %v1083 = vunpack.c.l.b16 %v1046
        %v1084 = vunpack.c.l.b16 %v1047
        %v1085 = vunpack.c.l.b16 %v1048
        %v1086 = vunpack.c.l.b16 %v1049
        %v1087 = vunpack.c.l.b16 %v1050
        %v1088 = vpack.c.b16 %v1073, %v1072
        %v1089 = vpack.c.b16 %v1075, %v1074
        %v1090 = vpack.c.b16 %v1077, %v1076
        %v1091 = vpack.c.b16 %v1079, %v1078
        %v1092 = vpack.c.b16 %v1081, %v1080
        %v1093 = vpack.c.b16 %v1083, %v1082
        %v1094 = vpack.c.b16 %v1085, %v1084
        %v1095 = vpack.c.b16 %v1087, %v1086
        %1104 = vmatprep.subr.bf16.mxu0 0
        %1105 = vmatpush1.bf16.msra.mxu0 %v1095
        %1106 = vmatprep.subr.bf16.mxu0 0
        %1107 = vmatpush1.bf16.msra.mxu0 %v1094
        %1108 = vmatprep.subr.bf16.mxu0 0
        %1109 = vmatpush1.bf16.msra.mxu0 %v1093
        %1110 = vmatprep.subr.bf16.mxu0 0
        %1111 = vmatpush1.bf16.msra.mxu0 %v1092
        %1112 = vmatprep.subr.bf16.mxu0 0
        %1113 = vmatpush1.bf16.msra.mxu0 %v1091
        %1114 = vmatprep.subr.bf16.mxu0 0
        %1115 = vmatpush1.bf16.msra.mxu0 %v1090
        %1116 = vmatprep.subr.bf16.mxu0 0
        %1117 = vmatpush1.bf16.msra.mxu0 %v1089
        %1118 = vmatprep.subr.bf16.mxu0 0
        %1119 = vmatpush1.bf16.msra.mxu0 %v1088
        %1120 = vmatprep.subr.bf16.mxu0 0
        %1121 = vmatpush2.bf16.msra.mxu0 0
        %1122 = vmatprep.subr.bf16.mxu0 0
        %1123 = vmatpush2.bf16.msra.mxu0 0
        %1124 = vmatprep.subr.bf16.mxu0 0
        %1125 = vmatpush2.bf16.msra.mxu0 0
        %1126 = vmatprep.subr.bf16.mxu0 0
        %1127 = vmatpush2.bf16.msra.mxu0 0
        %1128 = vmatprep.subr.bf16.mxu0 0
        %1129 = vmatpush2.bf16.msra.mxu0 0
        %1130 = vmatprep.subr.bf16.mxu0 0
        %1131 = vmatpush2.bf16.msra.mxu0 0
        %1132 = vmatprep.subr.bf16.mxu0 0
        %1133 = vmatpush2.bf16.msra.mxu0 0
        %1134 = vmatprep.subr.bf16.mxu0 0
        %1135 = vmatpush2.bf16.msra.mxu0 0
        %1136 = vmatprep.mubr.bf16.mxu0 0
        %1137 = vmatmul.mubr.bf16.gmra.mxu0 %v1051
        %v1138 = vpop.f32.mrf.mxu0
        %v1139 = vadd.f32 %v1055, %v1138
        %v1140 = vpop.f32.mrf.mxu0
        %v1141 = vpop.f32.mrf.mxu0
        %v1142 = vpop.f32.mrf.mxu0
        %1143 = vdwg.mxu0
        %v1144 = vmul.f32 %v1139, 0.5
        %v1145 = vmul.f32 %v1139, 0.70710677
        %v1146 = verf.f32.pop %v1145
        %v1147 = vadd.f32 %v1146, 1.0
        %v1148 = vmul.f32 %v1144, %v1147
        %v1149 = vld [vmem:[#allocation16] sm:$0xf]
        %v1150 = vld [vmem:[#allocation16 + $0x4] sm:$0xf]
        %v1151 = vld [vmem:[#allocation16 + $0x8] sm:$0xf]
        %v1152 = vld [vmem:[#allocation16 + $0xc] sm:$0xf]
        %v1153 = vld [vmem:[#allocation16 + $0x10] sm:$0xf]
        %v1154 = vld [vmem:[#allocation16 + $0x14] sm:$0xf]
        %v1155 = vld [vmem:[#allocation16 + $0x18] sm:$0xf]
        %v1156 = vld [vmem:[#allocation16 + $0x1c] sm:$0xf]
        %v1157 = vld [vmem:[#allocation16 + $0x20] sm:$0xf]
        %v1158 = vld [vmem:[#allocation16 + $0x24] sm:$0xf]
        %v1159 = vld [vmem:[#allocation16 + $0x28] sm:$0xf]
        %v1160 = vld [vmem:[#allocation16 + $0x2c] sm:$0xf]
        %v1161 = vld [vmem:[#allocation16 + $0x30] sm:$0xf]
        %v1162 = vld [vmem:[#allocation16 + $0x34] sm:$0xf]
        %v1163 = vld [vmem:[#allocation16 + $0x38] sm:$0xf]
        %v1164 = vld [vmem:[#allocation16 + $0x3c] sm:$0xf]
        %v1165 = vpack.c.bf16 %v1148, %v1148
        %v1166 = vlaneseq
        %v1167 = vshrl.u32 %v1166, 7
        %v1168 = vsub.s32 6, %v1167
        %v1169 = vrot.slane %v463, %v1168
        %v1186 = vunpack.c.l.b16 %v1149
        %v1187 = vunpack.c.l.b16 %v1150
        %v1188 = vunpack.c.l.b16 %v1151
        %v1189 = vunpack.c.l.b16 %v1152
        %v1190 = vunpack.c.l.b16 %v1153
        %v1191 = vunpack.c.l.b16 %v1154
        %v1192 = vunpack.c.l.b16 %v1155
        %v1193 = vunpack.c.l.b16 %v1156
        %v1194 = vunpack.c.l.b16 %v1157
        %v1195 = vunpack.c.l.b16 %v1158
        %v1196 = vunpack.c.l.b16 %v1159
        %v1197 = vunpack.c.l.b16 %v1160
        %v1198 = vunpack.c.l.b16 %v1161
        %v1199 = vunpack.c.l.b16 %v1162
        %v1200 = vunpack.c.l.b16 %v1163
        %v1201 = vunpack.c.l.b16 %v1164
        %v1202 = vpack.c.b16 %v1187, %v1186
        %v1203 = vpack.c.b16 %v1189, %v1188
        %v1204 = vpack.c.b16 %v1191, %v1190
        %v1205 = vpack.c.b16 %v1193, %v1192
        %v1206 = vpack.c.b16 %v1195, %v1194
        %v1207 = vpack.c.b16 %v1197, %v1196
        %v1208 = vpack.c.b16 %v1199, %v1198
        %v1209 = vpack.c.b16 %v1201, %v1200
        %1218 = vmatprep.subr.bf16.mxu0 0
        %1219 = vmatpush1.bf16.msra.mxu0 %v1209
        %1220 = vmatprep.subr.bf16.mxu0 0
        %1221 = vmatpush1.bf16.msra.mxu0 %v1208
        %1222 = vmatprep.subr.bf16.mxu0 0
        %1223 = vmatpush1.bf16.msra.mxu0 %v1207
        %1224 = vmatprep.subr.bf16.mxu0 0
        %1225 = vmatpush1.bf16.msra.mxu0 %v1206
        %1226 = vmatprep.subr.bf16.mxu0 0
        %1227 = vmatpush1.bf16.msra.mxu0 %v1205
        %1228 = vmatprep.subr.bf16.mxu0 0
        %1229 = vmatpush1.bf16.msra.mxu0 %v1204
        %1230 = vmatprep.subr.bf16.mxu0 0
        %1231 = vmatpush1.bf16.msra.mxu0 %v1203
        %1232 = vmatprep.subr.bf16.mxu0 0
        %1233 = vmatpush1.bf16.msra.mxu0 %v1202
        %1234 = vmatprep.subr.bf16.mxu0 0
        %1235 = vmatpush2.bf16.msra.mxu0 0
        %1236 = vmatprep.subr.bf16.mxu0 0
        %1237 = vmatpush2.bf16.msra.mxu0 0
        %1238 = vmatprep.subr.bf16.mxu0 0
        %1239 = vmatpush2.bf16.msra.mxu0 0
        %1240 = vmatprep.subr.bf16.mxu0 0
        %1241 = vmatpush2.bf16.msra.mxu0 0
        %1242 = vmatprep.subr.bf16.mxu0 0
        %1243 = vmatpush2.bf16.msra.mxu0 0
        %1244 = vmatprep.subr.bf16.mxu0 0
        %1245 = vmatpush2.bf16.msra.mxu0 0
        %1246 = vmatprep.subr.bf16.mxu0 0
        %1247 = vmatpush2.bf16.msra.mxu0 0
        %1248 = vmatprep.subr.bf16.mxu0 0
        %1249 = vmatpush2.bf16.msra.mxu0 0
        %1250 = vmatprep.mubr.bf16.mxu0 0
        %1251 = vmatmul.mubr.bf16.gmra.mxu0 %v1165
        %v1252 = vpop.f32.mrf.mxu0
        %v1253 = vadd.f32 %v1169, %v1252
        %v1254 = vpop.f32.mrf.mxu0
        %v1255 = vpop.f32.mrf.mxu0
        %v1256 = vpop.f32.mrf.mxu0
        %1257 = vdwg.mxu0
        %1258 = vst [vmem:[%s461] sm:$0xff] %v1253
        %s1259 = sand.u32 %s232, 1
        %s1260 = scalar_lea.sflag [#allocation4], %s1259
        %s1261 = sand.u32 %s232, 1
        %s1262 = smul.addr %s1261, 8
        %s1263 = scalar_lea.vmem [#allocation17], %s1262
        // Predicated region
        $region93: #{tpu_custom_call.1} parent=55 // pred_check
          %p1264 = pneg %p242
        $region94: #{tpu_custom_call.1} parent=55 // pred_check_branch
          %1266 = sbr.rel (%p1264) target = $region96
        $region95: #{tpu_custom_call.1} parent=55 // pred_region
          %s1268 = ssub.s32 128, 128
          %1269 = vsyncadd %s1260, %s1268
          %s1270 = smul.addr %s30, 128
          %s1271 = scalar_lea.hbm %s9, %s1270
          %s1273 = sshll.u32 %s1263, 4
          %s1274 = int_to_ptr.vmem [resolvable:$true] %s1273
          %1276 = dma.vmem_to_hbm [thread:$0]  %s1274, 128, %s1271, %s1260
        $region96: #{tpu_custom_call.1} parent=55 // pred_fallthru
          _
      $region56: #{tpu_custom_call.1} parent=5 // pred_fallthru
        _
      %p1277 = scmp.le.s32.totalorder 2, %s25
      // Predicated region
      $region97: #{tpu_custom_call.1} parent=5 // pred_check
        %p1278 = pneg %p1277
      $region98: #{tpu_custom_call.1} parent=5 // pred_check_branch
        %1280 = sbr.rel (%p1278) target = $region100
      $region99: #{tpu_custom_call.1} parent=5 // pred_region
        %s1281 = ssub.s32 %s25, 2
        // Predicated region
        $region101: #{tpu_custom_call.1} parent=99 // pred_check
          %p1282 = pneg %p248
        $region102: #{tpu_custom_call.1} parent=99 // pred_check_branch
          %1284 = sbr.rel (%p1282) target = $region104
        $region103: #{tpu_custom_call.1} parent=99 // pred_region
          %s1285 = sand.u32 %s233, 1
          %s1286 = scalar_lea.sflag [#allocation4], %s1285
          %s1287 = sand.u32 %s233, 1
          %s1288 = smul.addr %s1287, 8
          %s1289 = scalar_lea.vmem [#allocation17], %s1288
          %1290 = dma.done %s1286, 128
        $region104: #{tpu_custom_call.1} parent=99 // pred_fallthru
          _
      $region100: #{tpu_custom_call.1} parent=5 // pred_fallthru
        _
    $region6: #{tpu_custom_call.1} parent=1 // loop_footer
      %s29 = sadd.s32 1, %s25
    $region7: #{tpu_custom_call.1} parent=1 // loop_footer_branch
      %24 = sbr.rel target = $region3
    $region8: #{tpu_custom_call.1} parent=1 // loop_exit
      _
    %1291 = vsyncpa [#allocation3], 1
    %s1292 = scalar_lea.sflag [#allocation3], 1
    %1293 = vsyncpa %s1292, 1
    %1294 = vsyncpa [#allocation6], 1
    %1295 = vsyncpa [#allocation9], 1
    %1296 = vsyncpa [#allocation12], 1
    %1297 = vsyncpa [#allocation15], 1
    %1298 = vsyncpa [#allocation4], 1
    %s1299 = scalar_lea.sflag [#allocation4], 1
    %1300 = vsyncpa %s1299, 1

// kernel: tpu_custom_call.1
$region0: #{tpu_custom_call.1}
  #allocation0 [shape = 'u32[]', space=smem, size = 0x4, offset = 0x4, fixed_abs, tag = 'smem constant byte address 0x4 - core index']
  #allocation1 [shape = 'u32[144,128]{1,0:T(1,128)}', space=vmem, size = 0x12000, scoped, tag = 'internal scratch']
  %s0 = inlined_call_operand.hbm [shape: f32[16,128], index: 0, kind: input, shape index: {}]
  %s1 = inlined_call_operand.hbm [shape: f32[7,128], index: 1, kind: input, shape index: {}]
  %s2 = inlined_call_operand.hbm [shape: bf16[128,128], index: 2, kind: input, shape index: {}]
  %s3 = inlined_call_operand.hbm [shape: bf16[128,128], index: 3, kind: input, shape index: {}]
  %s4 = inlined_call_operand.hbm [shape: bf16[128,128], index: 4, kind: input, shape index: {}]
  %s5 = inlined_call_operand.hbm [shape: bf16[128,128], index: 5, kind: input, shape index: {}]
  %s6 = inlined_call_operand.hbm [shape: bf16[128,128], index: 6, kind: input, shape index: {}]
  %s7 = inlined_call_operand.hbm [shape: bf16[128,128], index: 7, kind: input, shape index: {}]
  %s8 = inlined_call_operand.hbm [shape: bf16[128,128], index: 8, kind: input, shape index: {}]
  %s9 = inlined_call_operand.hbm [shape: f32[16,128], index: 9, kind: output, shape index: {}]
  %s10 = sld [smem:[#allocation0]]
  $region105: #{tpu_custom_call.1} parent=0
    _
  %s12 = ssub.s32 1, %s10
  %s13 = scalar_select 0, %s12, %s10
  $region1: #{tpu_custom_call.1} parent=0
    #allocation2 [shape = 'u8[8192]{0}', space=vmem, size = 0x2000, scoped, tag = 'input window, operand 0']
    #allocation3 [shape = 's32[2]{0}', space=sflag, size = 0x8, scoped, tag = 'scoped memory for tpu_custom_call.1']
    #allocation4 [shape = 's32[2]{0}', space=sflag, size = 0x8, scoped, tag = 'scoped memory for tpu_custom_call.1']
    #allocation5 [shape = 'u8[4096]{0}', space=vmem, size = 0x1000, scoped, tag = 'input window, operand 1, single buffered']
    #allocation6 [shape = 's32[1]{0}', space=sflag, size = 0x4, scoped, tag = 'scoped memory for tpu_custom_call.1']
    #allocation7 [shape = 'u8[32768]{0}', space=vmem, size = 0x8000, scoped, tag = 'input window, operand 2, single buffered']
    #allocation8 [shape = 'u8[32768]{0}', space=vmem, size = 0x8000, scoped, tag = 'input window, operand 3, single buffered']
    #allocation9 [shape = 's32[1]{0}', space=sflag, size = 0x4, scoped, tag = 'scoped memory for tpu_custom_call.1']
    #allocation10 [shape = 'u8[32768]{0}', space=vmem, size = 0x8000, scoped, tag = 'input window, operand 4, single buffered']
    #allocation11 [shape = 'u8[32768]{0}', space=vmem, size = 0x8000, scoped, tag = 'input window, operand 5, single buffered']
    #allocation12 [shape = 's32[1]{0}', space=sflag, size = 0x4, scoped, tag = 'scoped memory for tpu_custom_call.1']
    #allocation13 [shape = 'u8[32768]{0}', space=vmem, size = 0x8000, scoped, tag = 'input window, operand 6, single buffered']
    #allocation14 [shape = 'u8[32768]{0}', space=vmem, size = 0x8000, scoped, tag = 'input window, operand 7, single buffered']
    #allocation15 [shape = 's32[1]{0}', space=sflag, size = 0x4, scoped, tag = 'scoped memory for tpu_custom_call.1']
    #allocation16 [shape = 'u8[32768]{0}', space=vmem, size = 0x8000, scoped, tag = 'input window, operand 8, single buffered']
    #allocation17 [shape = 'u8[8192]{0}', space=vmem, size = 0x2000, scoped, tag = 'output window, operand 0']
    %14 = vsyncpa [#allocation3], 0
    %s15 = scalar_lea.sflag [#allocation3], 1
    %16 = vsyncpa %s15, 0
    %17 = vsyncpa [#allocation6], 0
    %18 = vsyncpa [#allocation9], 0
    %19 = vsyncpa [#allocation12], 0
    %20 = vsyncpa [#allocation15], 0
    %21 = vsyncpa [#allocation4], 0
    %s22 = scalar_lea.sflag [#allocation4], 1
    %23 = vsyncpa %s22, 0
    loop: start=0, step=1, limit=4
    $region2: #{tpu_custom_call.1} parent=1 // loop_pre_header
      _
    $region3: #{tpu_custom_call.1} parent=1 // loop_header
      %s25 = sphi 0, %s29
      %p26 = scmp.ge.s32.totalorder %s25, 4
      %s35 = sphi 0, %s37
      %s38 = sphi 0, %s35
      %s39 = sphi 0, %s38
      %s55 = sphi 0, %s39
      %s59 = sphi 0, %s59
      %s61 = sphi 0, %s59
      %s62 = sphi 0, %s61
      %s76 = sphi 0, %s62
      %s80 = sphi 0, %s80
      %s82 = sphi 0, %s80
      %s83 = sphi 0, %s82
      %s97 = sphi 0, %s83
      %s101 = sphi 0, %s101
      %s103 = sphi 0, %s101
      %s104 = sphi 0, %s103
      %s118 = sphi 0, %s104
      %s122 = sphi 0, %s122
      %s124 = sphi 0, %s122
      %s125 = sphi 0, %s124
      %s139 = sphi 0, %s125
      %s143 = sphi 0, %s143
      %s145 = sphi 0, %s143
      %s146 = sphi 0, %s145
      %s160 = sphi 0, %s146
      %s164 = sphi 0, %s164
      %s166 = sphi 0, %s164
      %s167 = sphi 0, %s166
      %s181 = sphi 0, %s167
      %s185 = sphi 0, %s185
      %s187 = sphi 0, %s185
      %s188 = sphi 0, %s187
      %s202 = sphi 0, %s188
      %s206 = sphi 0, %s206
      %s208 = sphi 0, %s206
      %s209 = sphi 0, %s208
      %s223 = sphi 0, %s209
      %s229 = sphi 0, %s231
      %s232 = sphi 0, %s229
      %s233 = sphi 0, %s232
      %s249 = sphi 0, %s233
    $region4: #{tpu_custom_call.1} parent=1 // loop_header_branch
      %28 = sbr.rel (%p26) target = $region8
    $region5: #{tpu_custom_call.1} parent=1 // loop_body
      %s30 = ssub.s32 %s25, 1
      %s31 = ssub.s32 %s25, 2
      %s32 = sadd.s32 %s25, 1
      %s33 = ssub.s32 %s25, %s32
      %p34 = scmp.eq.s32.totalorder %s33, 0
      %s36 = sadd.s32 %s35, 1
      %s37 = scalar_select %p34, %s35, %s36
      %p40 = pneg %p34
      %p41 = scmp.eq.s32.totalorder %s25, 1
      %p42 = por %p40, %p41
      %p43 = scmp.ne.s32.totalorder %s35, %s38
      %p44 = scmp.eq.s32.totalorder %s25, 0
      %p45 = por %p43, %p44
      %p46 = scmp.ne.s32.totalorder %s35, %s38
      %p47 = scmp.eq.s32.totalorder %s30, 1
      %p48 = por %p46, %p47
      %p49 = scmp.ne.s32.totalorder %s38, %s39
      %p50 = scmp.eq.s32.totalorder %s30, 0
      %p51 = por %p49, %p50
      %p52 = scmp.ne.s32.totalorder %s38, %s39
      %p53 = scmp.eq.s32.totalorder %s31, 1
      %p54 = por %p52, %p53
      %p56 = scmp.ne.s32.totalorder %s39, %s55
      %p57 = scmp.eq.s32.totalorder %s31, 0
      %p58 = por %p56, %p57
      %s60 = sadd.s32 %s59, 1
      %p63 = scmp.eq.s32.totalorder %s25, 1
      %p64 = scmp.ne.s32.totalorder %s59, %s61
      %p65 = scmp.eq.s32.totalorder %s25, 0
      %p66 = por %p64, %p65
      %p67 = scmp.ne.s32.totalorder %s59, %s61
      %p68 = scmp.eq.s32.totalorder %s30, 1
      %p69 = por %p67, %p68
      %p70 = scmp.ne.s32.totalorder %s61, %s62
      %p71 = scmp.eq.s32.totalorder %s30, 0
      %p72 = por %p70, %p71
      %p73 = scmp.ne.s32.totalorder %s61, %s62
      %p74 = scmp.eq.s32.totalorder %s31, 1
      %p75 = por %p73, %p74
      %p77 = scmp.ne.s32.totalorder %s62, %s76
      %p78 = scmp.eq.s32.totalorder %s31, 0
      %p79 = por %p77, %p78
      %s81 = sadd.s32 %s80, 1
      %p84 = scmp.eq.s32.totalorder %s25, 1
      %p85 = scmp.ne.s32.totalorder %s80, %s82
      %p86 = scmp.eq.s32.totalorder %s25, 0
      %p87 = por %p85, %p86
      %p88 = scmp.ne.s32.totalorder %s80, %s82
      %p89 = scmp.eq.s32.totalorder %s30, 1
      %p90 = por %p88, %p89
      %p91 = scmp.ne.s32.totalorder %s82, %s83
      %p92 = scmp.eq.s32.totalorder %s30, 0
      %p93 = por %p91, %p92
      %p94 = scmp.ne.s32.totalorder %s82, %s83
      %p95 = scmp.eq.s32.totalorder %s31, 1
      %p96 = por %p94, %p95
      %p98 = scmp.ne.s32.totalorder %s83, %s97
      %p99 = scmp.eq.s32.totalorder %s31, 0
      %p100 = por %p98, %p99
      %s102 = sadd.s32 %s101, 1
      %p105 = scmp.eq.s32.totalorder %s25, 1
      %p106 = scmp.ne.s32.totalorder %s101, %s103
      %p107 = scmp.eq.s32.totalorder %s25, 0
      %p108 = por %p106, %p107
      %p109 = scmp.ne.s32.totalorder %s101, %s103
      %p110 = scmp.eq.s32.totalorder %s30, 1
      %p111 = por %p109, %p110
      %p112 = scmp.ne.s32.totalorder %s103, %s104
      %p113 = scmp.eq.s32.totalorder %s30, 0
      %p114 = por %p112, %p113
      %p115 = scmp.ne.s32.totalorder %s103, %s104
      %p116 = scmp.eq.s32.totalorder %s31, 1
      %p117 = por %p115, %p116
      %p119 = scmp.ne.s32.totalorder %s104, %s118
      %p120 = scmp.eq.s32.totalorder %s31, 0
      %p121 = por %p119, %p120
      %s123 = sadd.s32 %s122, 1
      %p126 = scmp.eq.s32.totalorder %s25, 1
      %p127 = scmp.ne.s32.totalorder %s122, %s124
      %p128 = scmp.eq.s32.totalorder %s25, 0
      %p129 = por %p127, %p128
      %p130 = scmp.ne.s32.totalorder %s122, %s124
      %p131 = scmp.eq.s32.totalorder %s30, 1
      %p132 = por %p130, %p131
      %p133 = scmp.ne.s32.totalorder %s124, %s125
      %p134 = scmp.eq.s32.totalorder %s30, 0
      %p135 = por %p133, %p134
      %p136 = scmp.ne.s32.totalorder %s124, %s125
      %p137 = scmp.eq.s32.totalorder %s31, 1
      %p138 = por %p136, %p137
      %p140 = scmp.ne.s32.totalorder %s125, %s139
      %p141 = scmp.eq.s32.totalorder %s31, 0
      %p142 = por %p140, %p141
      %s144 = sadd.s32 %s143, 1
      %p147 = scmp.eq.s32.totalorder %s25, 1
      %p148 = scmp.ne.s32.totalorder %s143, %s145
      %p149 = scmp.eq.s32.totalorder %s25, 0
      %p150 = por %p148, %p149
      %p151 = scmp.ne.s32.totalorder %s143, %s145
      %p152 = scmp.eq.s32.totalorder %s30, 1
      %p153 = por %p151, %p152
      %p154 = scmp.ne.s32.totalorder %s145, %s146
      %p155 = scmp.eq.s32.totalorder %s30, 0
      %p156 = por %p154, %p155
      %p157 = scmp.ne.s32.totalorder %s145, %s146
      %p158 = scmp.eq.s32.totalorder %s31, 1
      %p159 = por %p157, %p158
      %p161 = scmp.ne.s32.totalorder %s146, %s160
      %p162 = scmp.eq.s32.totalorder %s31, 0
      %p163 = por %p161, %p162
      %s165 = sadd.s32 %s164, 1
      %p168 = scmp.eq.s32.totalorder %s25, 1
      %p169 = scmp.ne.s32.totalorder %s164, %s166
      %p170 = scmp.eq.s32.totalorder %s25, 0
      %p171 = por %p169, %p170
      %p172 = scmp.ne.s32.totalorder %s164, %s166
      %p173 = scmp.eq.s32.totalorder %s30, 1
      %p174 = por %p172, %p173
      %p175 = scmp.ne.s32.totalorder %s166, %s167
      %p176 = scmp.eq.s32.totalorder %s30, 0
      %p177 = por %p175, %p176
      %p178 = scmp.ne.s32.totalorder %s166, %s167
      %p179 = scmp.eq.s32.totalorder %s31, 1
      %p180 = por %p178, %p179
      %p182 = scmp.ne.s32.totalorder %s167, %s181
      %p183 = scmp.eq.s32.totalorder %s31, 0
      %p184 = por %p182, %p183
      %s186 = sadd.s32 %s185, 1
      %p189 = scmp.eq.s32.totalorder %s25, 1
      %p190 = scmp.ne.s32.totalorder %s185, %s187
      %p191 = scmp.eq.s32.totalorder %s25, 0
      %p192 = por %p190, %p191
      %p193 = scmp.ne.s32.totalorder %s185, %s187
      %p194 = scmp.eq.s32.totalorder %s30, 1
      %p195 = por %p193, %p194
      %p196 = scmp.ne.s32.totalorder %s187, %s188
      %p197 = scmp.eq.s32.totalorder %s30, 0
      %p198 = por %p196, %p197
      %p199 = scmp.ne.s32.totalorder %s187, %s188
      %p200 = scmp.eq.s32.totalorder %s31, 1
      %p201 = por %p199, %p200
      %p203 = scmp.ne.s32.totalorder %s188, %s202
      %p204 = scmp.eq.s32.totalorder %s31, 0
      %p205 = por %p203, %p204
      %s207 = sadd.s32 %s206, 1
      %p210 = scmp.eq.s32.totalorder %s25, 1
      %p211 = scmp.ne.s32.totalorder %s206, %s208
      %p212 = scmp.eq.s32.totalorder %s25, 0
      %p213 = por %p211, %p212
      %p214 = scmp.ne.s32.totalorder %s206, %s208
      %p215 = scmp.eq.s32.totalorder %s30, 1
      %p216 = por %p214, %p215
      %p217 = scmp.ne.s32.totalorder %s208, %s209
      %p218 = scmp.eq.s32.totalorder %s30, 0
      %p219 = por %p217, %p218
      %p220 = scmp.ne.s32.totalorder %s208, %s209
      %p221 = scmp.eq.s32.totalorder %s31, 1
      %p222 = por %p220, %p221
      %p224 = scmp.ne.s32.totalorder %s209, %s223
      %p225 = scmp.eq.s32.totalorder %s31, 0
      %p226 = por %p224, %p225
      %s227 = ssub.s32 %s25, %s32
      %p228 = scmp.eq.s32.totalorder %s227, 0
      %s230 = sadd.s32 %s229, 1
      %s231 = scalar_select %p228, %s229, %s230
      %p234 = pneg %p228
      %p235 = scmp.eq.s32.totalorder %s25, 1
      %p236 = por %p234, %p235
      %p237 = scmp.ne.s32.totalorder %s229, %s232
      %p238 = scmp.eq.s32.totalorder %s25, 0
      %p239 = por %p237, %p238
      %p240 = scmp.ne.s32.totalorder %s229, %s232
      %p241 = scmp.eq.s32.totalorder %s30, 1
      %p242 = por %p240, %p241
      %p243 = scmp.ne.s32.totalorder %s232, %s233
      %p244 = scmp.eq.s32.totalorder %s30, 0
      %p245 = por %p243, %p244
      %p246 = scmp.ne.s32.totalorder %s232, %s233
      %p247 = scmp.eq.s32.totalorder %s31, 1
      %p248 = por %p246, %p247
      %p250 = scmp.ne.s32.totalorder %s233, %s249
      %p251 = scmp.eq.s32.totalorder %s31, 0
      %p252 = por %p250, %p251
      %p253 = scmp.le.s32.totalorder 1, %s25
      %p254 = scmp.lt.s32.totalorder %s25, 3
      %p255 = pnand %p253, %p254
      %p256 = pneg %p255
      // Predicated region
      $region9: #{tpu_custom_call.1} parent=5 // pred_check
        _
      $region10: #{tpu_custom_call.1} parent=5 // pred_check_branch
        %258 = sbr.rel (%p255) target = $region12
      $region11: #{tpu_custom_call.1} parent=5 // pred_region
        %s259 = ssub.s32 %s25, 1
        // Predicated region
        $region13: #{tpu_custom_call.1} parent=11 // pred_check
          %p260 = pneg %p72
        $region14: #{tpu_custom_call.1} parent=11 // pred_check_branch
          %262 = sbr.rel (%p260) target = $region16
        $region15: #{tpu_custom_call.1} parent=11 // pred_region
          %s264 = ssub.s32 128, 128
          %265 = vsyncadd [#allocation6], %s264
          %s267 = sshll.u32 [#allocation5], 4
          %s268 = int_to_ptr.vmem [resolvable:$true] %s267
          %270 = dma.hbm_to_vmem [thread:$0]  %s1, 128, %s268, [#allocation6]
        $region16: #{tpu_custom_call.1} parent=11 // pred_fallthru
          _
        // Predicated region
        $region17: #{tpu_custom_call.1} parent=11 // pred_check
          %p271 = pneg %p93
        $region18: #{tpu_custom_call.1} parent=11 // pred_check_branch
          %273 = sbr.rel (%p271) target = $region20
        $region19: #{tpu_custom_call.1} parent=11 // pred_region
          %s275 = ssub.s32 1024, 1024
          %276 = vsyncadd [#allocation6], %s275
          %s277 = sshll.u32 [#allocation7], 4
          %s278 = int_to_ptr.vmem [resolvable:$true] %s277
          %283 = dma.hbm_to_vmem [thread:$0]  %s2, 1024, %s278, [#allocation6], 64, 64, 4
        $region20: #{tpu_custom_call.1} parent=11 // pred_fallthru
          _
        // Predicated region
        $region21: #{tpu_custom_call.1} parent=11 // pred_check
          %p284 = pneg %p114
        $region22: #{tpu_custom_call.1} parent=11 // pred_check_branch
          %286 = sbr.rel (%p284) target = $region24
        $region23: #{tpu_custom_call.1} parent=11 // pred_region
          %s288 = ssub.s32 1024, 1024
          %289 = vsyncadd [#allocation9], %s288
          %s290 = sshll.u32 [#allocation8], 4
          %s291 = int_to_ptr.vmem [resolvable:$true] %s290
          %296 = dma.hbm_to_vmem [thread:$0]  %s3, 1024, %s291, [#allocation9], 64, 64, 4
        $region24: #{tpu_custom_call.1} parent=11 // pred_fallthru
          _
        // Predicated region
        $region25: #{tpu_custom_call.1} parent=11 // pred_check
          %p297 = pneg %p135
        $region26: #{tpu_custom_call.1} parent=11 // pred_check_branch
          %299 = sbr.rel (%p297) target = $region28
        $region27: #{tpu_custom_call.1} parent=11 // pred_region
          %s301 = ssub.s32 1024, 1024
          %302 = vsyncadd [#allocation9], %s301
          %s303 = sshll.u32 [#allocation10], 4
          %s304 = int_to_ptr.vmem [resolvable:$true] %s303
          %309 = dma.hbm_to_vmem [thread:$0]  %s4, 1024, %s304, [#allocation9], 64, 64, 4
        $region28: #{tpu_custom_call.1} parent=11 // pred_fallthru
          _
        // Predicated region
        $region29: #{tpu_custom_call.1} parent=11 // pred_check
          %p310 = pneg %p156
        $region30: #{tpu_custom_call.1} parent=11 // pred_check_branch
          %312 = sbr.rel (%p310) target = $region32
        $region31: #{tpu_custom_call.1} parent=11 // pred_region
          %s314 = ssub.s32 1024, 1024
          %315 = vsyncadd [#allocation12], %s314
          %s316 = sshll.u32 [#allocation11], 4
          %s317 = int_to_ptr.vmem [resolvable:$true] %s316
          %322 = dma.hbm_to_vmem [thread:$0]  %s5, 1024, %s317, [#allocation12], 64, 64, 4
        $region32: #{tpu_custom_call.1} parent=11 // pred_fallthru
          _
        // Predicated region
        $region33: #{tpu_custom_call.1} parent=11 // pred_check
          %p323 = pneg %p177
        $region34: #{tpu_custom_call.1} parent=11 // pred_check_branch
          %325 = sbr.rel (%p323) target = $region36
        $region35: #{tpu_custom_call.1} parent=11 // pred_region
          %s327 = ssub.s32 1024, 1024
          %328 = vsyncadd [#allocation12], %s327
          %s329 = sshll.u32 [#allocation13], 4
          %s330 = int_to_ptr.vmem [resolvable:$true] %s329
          %335 = dma.hbm_to_vmem [thread:$0]  %s6, 1024, %s330, [#allocation12], 64, 64, 4
        $region36: #{tpu_custom_call.1} parent=11 // pred_fallthru
          _
        // Predicated region
        $region37: #{tpu_custom_call.1} parent=11 // pred_check
          %p336 = pneg %p198
        $region38: #{tpu_custom_call.1} parent=11 // pred_check_branch
          %338 = sbr.rel (%p336) target = $region40
        $region39: #{tpu_custom_call.1} parent=11 // pred_region
          %s340 = ssub.s32 1024, 1024
          %341 = vsyncadd [#allocation15], %s340
          %s342 = sshll.u32 [#allocation14], 4
          %s343 = int_to_ptr.vmem [resolvable:$true] %s342
          %348 = dma.hbm_to_vmem [thread:$0]  %s7, 1024, %s343, [#allocation15], 64, 64, 4
        $region40: #{tpu_custom_call.1} parent=11 // pred_fallthru
          _
        // Predicated region
        $region41: #{tpu_custom_call.1} parent=11 // pred_check
          %p349 = pneg %p219
        $region42: #{tpu_custom_call.1} parent=11 // pred_check_branch
          %351 = sbr.rel (%p349) target = $region44
        $region43: #{tpu_custom_call.1} parent=11 // pred_region
          %s353 = ssub.s32 1024, 1024
          %354 = vsyncadd [#allocation15], %s353
          %s355 = sshll.u32 [#allocation16], 4
          %s356 = int_to_ptr.vmem [resolvable:$true] %s355
          %361 = dma.hbm_to_vmem [thread:$0]  %s8, 1024, %s356, [#allocation15], 64, 64, 4
        $region44: #{tpu_custom_call.1} parent=11 // pred_fallthru
          _
      $region12: #{tpu_custom_call.1} parent=5 // pred_fallthru
        _
      %p362 = scmp.lt.s32.totalorder %s25, 2
      // Predicated region
      $region45: #{tpu_custom_call.1} parent=5 // pred_check
        %p363 = pneg %p362
      $region46: #{tpu_custom_call.1} parent=5 // pred_check_branch
        %365 = sbr.rel (%p363) target = $region48
      $region47: #{tpu_custom_call.1} parent=5 // pred_region
        // Predicated region
        $region49: #{tpu_custom_call.1} parent=47 // pred_check
          %p366 = pneg %p45
        $region50: #{tpu_custom_call.1} parent=47 // pred_check_branch
          %368 = sbr.rel (%p366) target = $region52
        $region51: #{tpu_custom_call.1} parent=47 // pred_region
          %s369 = sand.u32 %s35, 1
          %s370 = scalar_lea.sflag [#allocation3], %s369
          %s371 = sand.u32 %s35, 1
          %s372 = smul.addr %s371, 8
          %s373 = scalar_lea.vmem [#allocation2], %s372
          %s375 = ssub.s32 128, 128
          %376 = vsyncadd %s370, %s375
          %s377 = smul.addr %s25, 128
          %s378 = scalar_lea.hbm %s0, %s377
          %s380 = sshll.u32 %s373, 4
          %s381 = int_to_ptr.vmem [resolvable:$true] %s380
          %383 = dma.hbm_to_vmem [thread:$0]  %s378, 128, %s381, %s370
        $region52: #{tpu_custom_call.1} parent=47 // pred_fallthru
          _
      $region48: #{tpu_custom_call.1} parent=5 // pred_fallthru
        _
      %p384 = scmp.le.s32.totalorder 1, %s25
      %p385 = scmp.lt.s32.totalorder %s25, 3
      %p386 = pnand %p384, %p385
      %p387 = pneg %p386
      // Predicated region
      $region53: #{tpu_custom_call.1} parent=5 // pred_check
        _
      $region54: #{tpu_custom_call.1} parent=5 // pred_check_branch
        %389 = sbr.rel (%p386) target = $region56
      $region55: #{tpu_custom_call.1} parent=5 // pred_region
        %s390 = ssub.s32 %s25, 1
        %s391 = sand.u32 %s38, 1
        %s392 = scalar_lea.sflag [#allocation3], %s391
        %s393 = sand.u32 %s38, 1
        %s394 = smul.addr %s393, 8
        %s395 = scalar_lea.vmem [#allocation2], %s394
        // Predicated region
        $region57: #{tpu_custom_call.1} parent=55 // pred_check
          %p396 = pneg %p51
        $region58: #{tpu_custom_call.1} parent=55 // pred_check_branch
          %398 = sbr.rel (%p396) target = $region60
        $region59: #{tpu_custom_call.1} parent=55 // pred_region
          %399 = dma.done %s392, 128
        $region60: #{tpu_custom_call.1} parent=55 // pred_fallthru
          _
        // Predicated region
        $region61: #{tpu_custom_call.1} parent=55 // pred_check
          %p400 = pneg %p72
        $region62: #{tpu_custom_call.1} parent=55 // pred_check_branch
          %402 = sbr.rel (%p400) target = $region64
        $region63: #{tpu_custom_call.1} parent=55 // pred_region
          %403 = dma.done [#allocation6], 128
        $region64: #{tpu_custom_call.1} parent=55 // pred_fallthru
          _
        // Predicated region
        $region65: #{tpu_custom_call.1} parent=55 // pred_check
          %p404 = pneg %p93
        $region66: #{tpu_custom_call.1} parent=55 // pred_check_branch
          %406 = sbr.rel (%p404) target = $region68
        $region67: #{tpu_custom_call.1} parent=55 // pred_region
          %407 = dma.done [#allocation6], 1024
        $region68: #{tpu_custom_call.1} parent=55 // pred_fallthru
          _
        // Predicated region
        $region69: #{tpu_custom_call.1} parent=55 // pred_check
          %p408 = pneg %p114
        $region70: #{tpu_custom_call.1} parent=55 // pred_check_branch
          %410 = sbr.rel (%p408) target = $region72
        $region71: #{tpu_custom_call.1} parent=55 // pred_region
          %411 = dma.done [#allocation9], 1024
        $region72: #{tpu_custom_call.1} parent=55 // pred_fallthru
          _
        // Predicated region
        $region73: #{tpu_custom_call.1} parent=55 // pred_check
          %p412 = pneg %p135
        $region74: #{tpu_custom_call.1} parent=55 // pred_check_branch
          %414 = sbr.rel (%p412) target = $region76
        $region75: #{tpu_custom_call.1} parent=55 // pred_region
          %415 = dma.done [#allocation9], 1024
        $region76: #{tpu_custom_call.1} parent=55 // pred_fallthru
          _
        // Predicated region
        $region77: #{tpu_custom_call.1} parent=55 // pred_check
          %p416 = pneg %p156
        $region78: #{tpu_custom_call.1} parent=55 // pred_check_branch
          %418 = sbr.rel (%p416) target = $region80
        $region79: #{tpu_custom_call.1} parent=55 // pred_region
          %419 = dma.done [#allocation12], 1024
        $region80: #{tpu_custom_call.1} parent=55 // pred_fallthru
          _
        // Predicated region
        $region81: #{tpu_custom_call.1} parent=55 // pred_check
          %p420 = pneg %p177
        $region82: #{tpu_custom_call.1} parent=55 // pred_check_branch
          %422 = sbr.rel (%p420) target = $region84
        $region83: #{tpu_custom_call.1} parent=55 // pred_region
          %423 = dma.done [#allocation12], 1024
        $region84: #{tpu_custom_call.1} parent=55 // pred_fallthru
          _
        // Predicated region
        $region85: #{tpu_custom_call.1} parent=55 // pred_check
          %p424 = pneg %p198
        $region86: #{tpu_custom_call.1} parent=55 // pred_check_branch
          %426 = sbr.rel (%p424) target = $region88
        $region87: #{tpu_custom_call.1} parent=55 // pred_region
          %427 = dma.done [#allocation15], 1024
        $region88: #{tpu_custom_call.1} parent=55 // pred_fallthru
          _
        // Predicated region
        $region89: #{tpu_custom_call.1} parent=55 // pred_check
          %p428 = pneg %p219
        $region90: #{tpu_custom_call.1} parent=55 // pred_check_branch
          %430 = sbr.rel (%p428) target = $region92
        $region91: #{tpu_custom_call.1} parent=55 // pred_region
          %431 = dma.done [#allocation15], 1024
        $region92: #{tpu_custom_call.1} parent=55 // pred_fallthru
          _
        %s432 = sand.u32 %s38, 1
        %s433 = scalar_lea.sflag [#allocation3], %s432
        %s434 = sand.u32 %s38, 1
        %s435 = smul.addr %s434, 8
        %s436 = scalar_lea.vmem [#allocation2], %s435
        %p437 = pneg %p51
        %p438 = pneg %p48
        %p439 = pneg %p72
        %p440 = pneg %p69
        %p441 = pneg %p93
        %p442 = pneg %p90
        %p443 = pneg %p114
        %p444 = pneg %p111
        %p445 = pneg %p135
        %p446 = pneg %p132
        %p447 = pneg %p156
        %p448 = pneg %p153
        %p449 = pneg %p177
        %p450 = pneg %p174
        %p451 = pneg %p198
        %p452 = pneg %p195
        %p453 = pneg %p219
        %p454 = pneg %p216
        %p455 = pneg %p245
        %p456 = pneg %p242
        %s457 = sand.u32 %s232, 1
        %s458 = scalar_lea.sflag [#allocation4], %s457
        %s459 = sand.u32 %s232, 1
        %s460 = smul.addr %s459, 8
        %s461 = scalar_lea.vmem [#allocation17], %s460
        %v463 = vld [vmem:[#allocation5] sm:$0x7f]
        %v464 = vld [vmem:[%s395] sm:$0xff]
        %v465 = vld [vmem:[#allocation7] sm:$0xf]
        %v466 = vld [vmem:[#allocation7 + $0x4] sm:$0xf]
        %v467 = vld [vmem:[#allocation7 + $0x8] sm:$0xf]
        %v468 = vld [vmem:[#allocation7 + $0xc] sm:$0xf]
        %v469 = vld [vmem:[#allocation7 + $0x10] sm:$0xf]
        %v470 = vld [vmem:[#allocation7 + $0x14] sm:$0xf]
        %v471 = vld [vmem:[#allocation7 + $0x18] sm:$0xf]
        %v472 = vld [vmem:[#allocation7 + $0x1c] sm:$0xf]
        %v473 = vld [vmem:[#allocation7 + $0x20] sm:$0xf]
        %v474 = vld [vmem:[#allocation7 + $0x24] sm:$0xf]
        %v475 = vld [vmem:[#allocation7 + $0x28] sm:$0xf]
        %v476 = vld [vmem:[#allocation7 + $0x2c] sm:$0xf]
        %v477 = vld [vmem:[#allocation7 + $0x30] sm:$0xf]
        %v478 = vld [vmem:[#allocation7 + $0x34] sm:$0xf]
        %v479 = vld [vmem:[#allocation7 + $0x38] sm:$0xf]
        %v480 = vld [vmem:[#allocation7 + $0x3c] sm:$0xf]
        %v481 = vpack.c.bf16 %v464, %v464
        %v482 = vlaneseq
        %v483 = vshrl.u32 %v482, 7
        %v484 = vsub.s32 0, %v483
        %v485 = vrot.slane %v463, %v484
        %v502 = vunpack.c.l.b16 %v465
        %v503 = vunpack.c.l.b16 %v466
        %v504 = vunpack.c.l.b16 %v467
        %v505 = vunpack.c.l.b16 %v468
        %v506 = vunpack.c.l.b16 %v469
        %v507 = vunpack.c.l.b16 %v470
        %v508 = vunpack.c.l.b16 %v471
        %v509 = vunpack.c.l.b16 %v472
        %v510 = vunpack.c.l.b16 %v473
        %v511 = vunpack.c.l.b16 %v474
        %v512 = vunpack.c.l.b16 %v475
        %v513 = vunpack.c.l.b16 %v476
        %v514 = vunpack.c.l.b16 %v477
        %v515 = vunpack.c.l.b16 %v478
        %v516 = vunpack.c.l.b16 %v479
        %v517 = vunpack.c.l.b16 %v480
        %v518 = vpack.c.b16 %v503, %v502
        %v519 = vpack.c.b16 %v505, %v504
        %v520 = vpack.c.b16 %v507, %v506
        %v521 = vpack.c.b16 %v509, %v508
        %v522 = vpack.c.b16 %v511, %v510
        %v523 = vpack.c.b16 %v513, %v512
        %v524 = vpack.c.b16 %v515, %v514
        %v525 = vpack.c.b16 %v517, %v516
        %534 = vmatprep.subr.bf16.mxu0 0
        %535 = vmatpush1.bf16.msra.mxu0 %v525
        %536 = vmatprep.subr.bf16.mxu0 0
        %537 = vmatpush1.bf16.msra.mxu0 %v524
        %538 = vmatprep.subr.bf16.mxu0 0
        %539 = vmatpush1.bf16.msra.mxu0 %v523
        %540 = vmatprep.subr.bf16.mxu0 0
        %541 = vmatpush1.bf16.msra.mxu0 %v522
        %542 = vmatprep.subr.bf16.mxu0 0
        %543 = vmatpush1.bf16.msra.mxu0 %v521
        %544 = vmatprep.subr.bf16.mxu0 0
        %545 = vmatpush1.bf16.msra.mxu0 %v520
        %546 = vmatprep.subr.bf16.mxu0 0
        %547 = vmatpush1.bf16.msra.mxu0 %v519
        %548 = vmatprep.subr.bf16.mxu0 0
        %549 = vmatpush1.bf16.msra.mxu0 %v518
        %550 = vmatprep.subr.bf16.mxu0 0
        %551 = vmatpush2.bf16.msra.mxu0 0
        %552 = vmatprep.subr.bf16.mxu0 0
        %553 = vmatpush2.bf16.msra.mxu0 0
        %554 = vmatprep.subr.bf16.mxu0 0
        %555 = vmatpush2.bf16.msra.mxu0 0
        %556 = vmatprep.subr.bf16.mxu0 0
        %557 = vmatpush2.bf16.msra.mxu0 0
        %558 = vmatprep.subr.bf16.mxu0 0
        %559 = vmatpush2.bf16.msra.mxu0 0
        %560 = vmatprep.subr.bf16.mxu0 0
        %561 = vmatpush2.bf16.msra.mxu0 0
        %562 = vmatprep.subr.bf16.mxu0 0
        %563 = vmatpush2.bf16.msra.mxu0 0
        %564 = vmatprep.subr.bf16.mxu0 0
        %565 = vmatpush2.bf16.msra.mxu0 0
        %566 = vmatprep.mubr.bf16.mxu0 0
        %567 = vmatmul.mubr.bf16.gmra.mxu0 %v481
        %v568 = vpop.f32.mrf.mxu0
        %v569 = vadd.f32 %v485, %v568
        %v570 = vpop.f32.mrf.mxu0
        %v571 = vpop.f32.mrf.mxu0
        %v572 = vpop.f32.mrf.mxu0
        %573 = vdwg.mxu0
        %v574 = vmul.f32 %v569, 0.5
        %v575 = vmul.f32 %v569, 0.70710677
        %v576 = verf.f32.pop %v575
        %v577 = vadd.f32 %v576, 1.0
        %v578 = vmul.f32 %v574, %v577
        %v579 = vld [vmem:[#allocation8] sm:$0xf]
        %v580 = vld [vmem:[#allocation8 + $0x4] sm:$0xf]
        %v581 = vld [vmem:[#allocation8 + $0x8] sm:$0xf]
        %v582 = vld [vmem:[#allocation8 + $0xc] sm:$0xf]
        %v583 = vld [vmem:[#allocation8 + $0x10] sm:$0xf]
        %v584 = vld [vmem:[#allocation8 + $0x14] sm:$0xf]
        %v585 = vld [vmem:[#allocation8 + $0x18] sm:$0xf]
        %v586 = vld [vmem:[#allocation8 + $0x1c] sm:$0xf]
        %v587 = vld [vmem:[#allocation8 + $0x20] sm:$0xf]
        %v588 = vld [vmem:[#allocation8 + $0x24] sm:$0xf]
        %v589 = vld [vmem:[#allocation8 + $0x28] sm:$0xf]
        %v590 = vld [vmem:[#allocation8 + $0x2c] sm:$0xf]
        %v591 = vld [vmem:[#allocation8 + $0x30] sm:$0xf]
        %v592 = vld [vmem:[#allocation8 + $0x34] sm:$0xf]
        %v593 = vld [vmem:[#allocation8 + $0x38] sm:$0xf]
        %v594 = vld [vmem:[#allocation8 + $0x3c] sm:$0xf]
        %v595 = vpack.c.bf16 %v578, %v578
        %v596 = vlaneseq
        %v597 = vshrl.u32 %v596, 7
        %v598 = vsub.s32 1, %v597
        %v599 = vrot.slane %v463, %v598
        %v616 = vunpack.c.l.b16 %v579
        %v617 = vunpack.c.l.b16 %v580
        %v618 = vunpack.c.l.b16 %v581
        %v619 = vunpack.c.l.b16 %v582
        %v620 = vunpack.c.l.b16 %v583
        %v621 = vunpack.c.l.b16 %v584
        %v622 = vunpack.c.l.b16 %v585
        %v623 = vunpack.c.l.b16 %v586
        %v624 = vunpack.c.l.b16 %v587
        %v625 = vunpack.c.l.b16 %v588
        %v626 = vunpack.c.l.b16 %v589
        %v627 = vunpack.c.l.b16 %v590
        %v628 = vunpack.c.l.b16 %v591
        %v629 = vunpack.c.l.b16 %v592
        %v630 = vunpack.c.l.b16 %v593
        %v631 = vunpack.c.l.b16 %v594
        %v632 = vpack.c.b16 %v617, %v616
        %v633 = vpack.c.b16 %v619, %v618
        %v634 = vpack.c.b16 %v621, %v620
        %v635 = vpack.c.b16 %v623, %v622
        %v636 = vpack.c.b16 %v625, %v624
        %v637 = vpack.c.b16 %v627, %v626
        %v638 = vpack.c.b16 %v629, %v628
        %v639 = vpack.c.b16 %v631, %v630
        %648 = vmatprep.subr.bf16.mxu0 0
        %649 = vmatpush1.bf16.msra.mxu0 %v639
        %650 = vmatprep.subr.bf16.mxu0 0
        %651 = vmatpush1.bf16.msra.mxu0 %v638
        %652 = vmatprep.subr.bf16.mxu0 0
        %653 = vmatpush1.bf16.msra.mxu0 %v637
        %654 = vmatprep.subr.bf16.mxu0 0
        %655 = vmatpush1.bf16.msra.mxu0 %v636
        %656 = vmatprep.subr.bf16.mxu0 0
        %657 = vmatpush1.bf16.msra.mxu0 %v635
        %658 = vmatprep.subr.bf16.mxu0 0
        %659 = vmatpush1.bf16.msra.mxu0 %v634
        %660 = vmatprep.subr.bf16.mxu0 0
        %661 = vmatpush1.bf16.msra.mxu0 %v633
        %662 = vmatprep.subr.bf16.mxu0 0
        %663 = vmatpush1.bf16.msra.mxu0 %v632
        %664 = vmatprep.subr.bf16.mxu0 0
        %665 = vmatpush2.bf16.msra.mxu0 0
        %666 = vmatprep.subr.bf16.mxu0 0
        %667 = vmatpush2.bf16.msra.mxu0 0
        %668 = vmatprep.subr.bf16.mxu0 0
        %669 = vmatpush2.bf16.msra.mxu0 0
        %670 = vmatprep.subr.bf16.mxu0 0
        %671 = vmatpush2.bf16.msra.mxu0 0
        %672 = vmatprep.subr.bf16.mxu0 0
        %673 = vmatpush2.bf16.msra.mxu0 0
        %674 = vmatprep.subr.bf16.mxu0 0
        %675 = vmatpush2.bf16.msra.mxu0 0
        %676 = vmatprep.subr.bf16.mxu0 0
        %677 = vmatpush2.bf16.msra.mxu0 0
        %678 = vmatprep.subr.bf16.mxu0 0
        %679 = vmatpush2.bf16.msra.mxu0 0
        %680 = vmatprep.mubr.bf16.mxu0 0
        %681 = vmatmul.mubr.bf16.gmra.mxu0 %v595
        %v682 = vpop.f32.mrf.mxu0
        %v683 = vadd.f32 %v599, %v682
        %v684 = vpop.f32.mrf.mxu0
        %v685 = vpop.f32.mrf.mxu0
        %v686 = vpop.f32.mrf.mxu0
        %687 = vdwg.mxu0
        %v688 = vmul.f32 %v683, 0.5
        %v689 = vmul.f32 %v683, 0.70710677
        %v690 = verf.f32.pop %v689
        %v691 = vadd.f32 %v690, 1.0
        %v692 = vmul.f32 %v688, %v691
        %v693 = vld [vmem:[#allocation10] sm:$0xf]
        %v694 = vld [vmem:[#allocation10 + $0x4] sm:$0xf]
        %v695 = vld [vmem:[#allocation10 + $0x8] sm:$0xf]
        %v696 = vld [vmem:[#allocation10 + $0xc] sm:$0xf]
        %v697 = vld [vmem:[#allocation10 + $0x10] sm:$0xf]
        %v698 = vld [vmem:[#allocation10 + $0x14] sm:$0xf]
        %v699 = vld [vmem:[#allocation10 + $0x18] sm:$0xf]
        %v700 = vld [vmem:[#allocation10 + $0x1c] sm:$0xf]
        %v701 = vld [vmem:[#allocation10 + $0x20] sm:$0xf]
        %v702 = vld [vmem:[#allocation10 + $0x24] sm:$0xf]
        %v703 = vld [vmem:[#allocation10 + $0x28] sm:$0xf]
        %v704 = vld [vmem:[#allocation10 + $0x2c] sm:$0xf]
        %v705 = vld [vmem:[#allocation10 + $0x30] sm:$0xf]
        %v706 = vld [vmem:[#allocation10 + $0x34] sm:$0xf]
        %v707 = vld [vmem:[#allocation10 + $0x38] sm:$0xf]
        %v708 = vld [vmem:[#allocation10 + $0x3c] sm:$0xf]
        %v709 = vpack.c.bf16 %v692, %v692
        %v710 = vlaneseq
        %v711 = vshrl.u32 %v710, 7
        %v712 = vsub.s32 2, %v711
        %v713 = vrot.slane %v463, %v712
        %v730 = vunpack.c.l.b16 %v693
        %v731 = vunpack.c.l.b16 %v694
        %v732 = vunpack.c.l.b16 %v695
        %v733 = vunpack.c.l.b16 %v696
        %v734 = vunpack.c.l.b16 %v697
        %v735 = vunpack.c.l.b16 %v698
        %v736 = vunpack.c.l.b16 %v699
        %v737 = vunpack.c.l.b16 %v700
        %v738 = vunpack.c.l.b16 %v701
        %v739 = vunpack.c.l.b16 %v702
        %v740 = vunpack.c.l.b16 %v703
        %v741 = vunpack.c.l.b16 %v704
        %v742 = vunpack.c.l.b16 %v705
        %v743 = vunpack.c.l.b16 %v706
        %v744 = vunpack.c.l.b16 %v707
        %v745 = vunpack.c.l.b16 %v708
        %v746 = vpack.c.b16 %v731, %v730
        %v747 = vpack.c.b16 %v733, %v732
        %v748 = vpack.c.b16 %v735, %v734
        %v749 = vpack.c.b16 %v737, %v736
        %v750 = vpack.c.b16 %v739, %v738
        %v751 = vpack.c.b16 %v741, %v740
        %v752 = vpack.c.b16 %v743, %v742
        %v753 = vpack.c.b16 %v745, %v744
        %762 = vmatprep.subr.bf16.mxu0 0
        %763 = vmatpush1.bf16.msra.mxu0 %v753
        %764 = vmatprep.subr.bf16.mxu0 0
        %765 = vmatpush1.bf16.msra.mxu0 %v752
        %766 = vmatprep.subr.bf16.mxu0 0
        %767 = vmatpush1.bf16.msra.mxu0 %v751
        %768 = vmatprep.subr.bf16.mxu0 0
        %769 = vmatpush1.bf16.msra.mxu0 %v750
        %770 = vmatprep.subr.bf16.mxu0 0
        %771 = vmatpush1.bf16.msra.mxu0 %v749
        %772 = vmatprep.subr.bf16.mxu0 0
        %773 = vmatpush1.bf16.msra.mxu0 %v748
        %774 = vmatprep.subr.bf16.mxu0 0
        %775 = vmatpush1.bf16.msra.mxu0 %v747
        %776 = vmatprep.subr.bf16.mxu0 0
        %777 = vmatpush1.bf16.msra.mxu0 %v746
        %778 = vmatprep.subr.bf16.mxu0 0
        %779 = vmatpush2.bf16.msra.mxu0 0
        %780 = vmatprep.subr.bf16.mxu0 0
        %781 = vmatpush2.bf16.msra.mxu0 0
        %782 = vmatprep.subr.bf16.mxu0 0
        %783 = vmatpush2.bf16.msra.mxu0 0
        %784 = vmatprep.subr.bf16.mxu0 0
        %785 = vmatpush2.bf16.msra.mxu0 0
        %786 = vmatprep.subr.bf16.mxu0 0
        %787 = vmatpush2.bf16.msra.mxu0 0
        %788 = vmatprep.subr.bf16.mxu0 0
        %789 = vmatpush2.bf16.msra.mxu0 0
        %790 = vmatprep.subr.bf16.mxu0 0
        %791 = vmatpush2.bf16.msra.mxu0 0
        %792 = vmatprep.subr.bf16.mxu0 0
        %793 = vmatpush2.bf16.msra.mxu0 0
        %794 = vmatprep.mubr.bf16.mxu0 0
        %795 = vmatmul.mubr.bf16.gmra.mxu0 %v709
        %v796 = vpop.f32.mrf.mxu0
        %v797 = vadd.f32 %v713, %v796
        %v798 = vpop.f32.mrf.mxu0
        %v799 = vpop.f32.mrf.mxu0
        %v800 = vpop.f32.mrf.mxu0
        %801 = vdwg.mxu0
        %v802 = vmul.f32 %v797, 0.5
        %v803 = vmul.f32 %v797, 0.70710677
        %v804 = verf.f32.pop %v803
        %v805 = vadd.f32 %v804, 1.0
        %v806 = vmul.f32 %v802, %v805
        %v807 = vld [vmem:[#allocation11] sm:$0xf]
        %v808 = vld [vmem:[#allocation11 + $0x4] sm:$0xf]
        %v809 = vld [vmem:[#allocation11 + $0x8] sm:$0xf]
        %v810 = vld [vmem:[#allocation11 + $0xc] sm:$0xf]
        %v811 = vld [vmem:[#allocation11 + $0x10] sm:$0xf]
        %v812 = vld [vmem:[#allocation11 + $0x14] sm:$0xf]
        %v813 = vld [vmem:[#allocation11 + $0x18] sm:$0xf]
        %v814 = vld [vmem:[#allocation11 + $0x1c] sm:$0xf]
        %v815 = vld [vmem:[#allocation11 + $0x20] sm:$0xf]
        %v816 = vld [vmem:[#allocation11 + $0x24] sm:$0xf]
        %v817 = vld [vmem:[#allocation11 + $0x28] sm:$0xf]
        %v818 = vld [vmem:[#allocation11 + $0x2c] sm:$0xf]
        %v819 = vld [vmem:[#allocation11 + $0x30] sm:$0xf]
        %v820 = vld [vmem:[#allocation11 + $0x34] sm:$0xf]
        %v821 = vld [vmem:[#allocation11 + $0x38] sm:$0xf]
        %v822 = vld [vmem:[#allocation11 + $0x3c] sm:$0xf]
        %v823 = vpack.c.bf16 %v806, %v806
        %v824 = vlaneseq
        %v825 = vshrl.u32 %v824, 7
        %v826 = vsub.s32 3, %v825
        %v827 = vrot.slane %v463, %v826
        %v844 = vunpack.c.l.b16 %v807
        %v845 = vunpack.c.l.b16 %v808
        %v846 = vunpack.c.l.b16 %v809
        %v847 = vunpack.c.l.b16 %v810
        %v848 = vunpack.c.l.b16 %v811
        %v849 = vunpack.c.l.b16 %v812
        %v850 = vunpack.c.l.b16 %v813
        %v851 = vunpack.c.l.b16 %v814
        %v852 = vunpack.c.l.b16 %v815
        %v853 = vunpack.c.l.b16 %v816
        %v854 = vunpack.c.l.b16 %v817
        %v855 = vunpack.c.l.b16 %v818
        %v856 = vunpack.c.l.b16 %v819
        %v857 = vunpack.c.l.b16 %v820
        %v858 = vunpack.c.l.b16 %v821
        %v859 = vunpack.c.l.b16 %v822
        %v860 = vpack.c.b16 %v845, %v844
        %v861 = vpack.c.b16 %v847, %v846
        %v862 = vpack.c.b16 %v849, %v848
        %v863 = vpack.c.b16 %v851, %v850
        %v864 = vpack.c.b16 %v853, %v852
        %v865 = vpack.c.b16 %v855, %v854
        %v866 = vpack.c.b16 %v857, %v856
        %v867 = vpack.c.b16 %v859, %v858
        %876 = vmatprep.subr.bf16.mxu0 0
        %877 = vmatpush1.bf16.msra.mxu0 %v867
        %878 = vmatprep.subr.bf16.mxu0 0
        %879 = vmatpush1.bf16.msra.mxu0 %v866
        %880 = vmatprep.subr.bf16.mxu0 0
        %881 = vmatpush1.bf16.msra.mxu0 %v865
        %882 = vmatprep.subr.bf16.mxu0 0
        %883 = vmatpush1.bf16.msra.mxu0 %v864
        %884 = vmatprep.subr.bf16.mxu0 0
        %885 = vmatpush1.bf16.msra.mxu0 %v863
        %886 = vmatprep.subr.bf16.mxu0 0
        %887 = vmatpush1.bf16.msra.mxu0 %v862
        %888 = vmatprep.subr.bf16.mxu0 0
        %889 = vmatpush1.bf16.msra.mxu0 %v861
        %890 = vmatprep.subr.bf16.mxu0 0
        %891 = vmatpush1.bf16.msra.mxu0 %v860
        %892 = vmatprep.subr.bf16.mxu0 0
        %893 = vmatpush2.bf16.msra.mxu0 0
        %894 = vmatprep.subr.bf16.mxu0 0
        %895 = vmatpush2.bf16.msra.mxu0 0
        %896 = vmatprep.subr.bf16.mxu0 0
        %897 = vmatpush2.bf16.msra.mxu0 0
        %898 = vmatprep.subr.bf16.mxu0 0
        %899 = vmatpush2.bf16.msra.mxu0 0
        %900 = vmatprep.subr.bf16.mxu0 0
        %901 = vmatpush2.bf16.msra.mxu0 0
        %902 = vmatprep.subr.bf16.mxu0 0
        %903 = vmatpush2.bf16.msra.mxu0 0
        %904 = vmatprep.subr.bf16.mxu0 0
        %905 = vmatpush2.bf16.msra.mxu0 0
        %906 = vmatprep.subr.bf16.mxu0 0
        %907 = vmatpush2.bf16.msra.mxu0 0
        %908 = vmatprep.mubr.bf16.mxu0 0
        %909 = vmatmul.mubr.bf16.gmra.mxu0 %v823
        %v910 = vpop.f32.mrf.mxu0
        %v911 = vadd.f32 %v827, %v910
        %v912 = vpop.f32.mrf.mxu0
        %v913 = vpop.f32.mrf.mxu0
        %v914 = vpop.f32.mrf.mxu0
        %915 = vdwg.mxu0
        %v916 = vmul.f32 %v911, 0.5
        %v917 = vmul.f32 %v911, 0.70710677
        %v918 = verf.f32.pop %v917
        %v919 = vadd.f32 %v918, 1.0
        %v920 = vmul.f32 %v916, %v919
        %v921 = vld [vmem:[#allocation13] sm:$0xf]
        %v922 = vld [vmem:[#allocation13 + $0x4] sm:$0xf]
        %v923 = vld [vmem:[#allocation13 + $0x8] sm:$0xf]
        %v924 = vld [vmem:[#allocation13 + $0xc] sm:$0xf]
        %v925 = vld [vmem:[#allocation13 + $0x10] sm:$0xf]
        %v926 = vld [vmem:[#allocation13 + $0x14] sm:$0xf]
        %v927 = vld [vmem:[#allocation13 + $0x18] sm:$0xf]
        %v928 = vld [vmem:[#allocation13 + $0x1c] sm:$0xf]
        %v929 = vld [vmem:[#allocation13 + $0x20] sm:$0xf]
        %v930 = vld [vmem:[#allocation13 + $0x24] sm:$0xf]
        %v931 = vld [vmem:[#allocation13 + $0x28] sm:$0xf]
        %v932 = vld [vmem:[#allocation13 + $0x2c] sm:$0xf]
        %v933 = vld [vmem:[#allocation13 + $0x30] sm:$0xf]
        %v934 = vld [vmem:[#allocation13 + $0x34] sm:$0xf]
        %v935 = vld [vmem:[#allocation13 + $0x38] sm:$0xf]
        %v936 = vld [vmem:[#allocation13 + $0x3c] sm:$0xf]
        %v937 = vpack.c.bf16 %v920, %v920
        %v938 = vlaneseq
        %v939 = vshrl.u32 %v938, 7
        %v940 = vsub.s32 4, %v939
        %v941 = vrot.slane %v463, %v940
        %v958 = vunpack.c.l.b16 %v921
        %v959 = vunpack.c.l.b16 %v922
        %v960 = vunpack.c.l.b16 %v923
        %v961 = vunpack.c.l.b16 %v924
        %v962 = vunpack.c.l.b16 %v925
        %v963 = vunpack.c.l.b16 %v926
        %v964 = vunpack.c.l.b16 %v927
        %v965 = vunpack.c.l.b16 %v928
        %v966 = vunpack.c.l.b16 %v929
        %v967 = vunpack.c.l.b16 %v930
        %v968 = vunpack.c.l.b16 %v931
        %v969 = vunpack.c.l.b16 %v932
        %v970 = vunpack.c.l.b16 %v933
        %v971 = vunpack.c.l.b16 %v934
        %v972 = vunpack.c.l.b16 %v935
        %v973 = vunpack.c.l.b16 %v936
        %v974 = vpack.c.b16 %v959, %v958
        %v975 = vpack.c.b16 %v961, %v960
        %v976 = vpack.c.b16 %v963, %v962
        %v977 = vpack.c.b16 %v965, %v964
        %v978 = vpack.c.b16 %v967, %v966
        %v979 = vpack.c.b16 %v969, %v968
        %v980 = vpack.c.b16 %v971, %v970
        %v981 = vpack.c.b16 %v973, %v972
        %990 = vmatprep.subr.bf16.mxu0 0
        %991 = vmatpush1.bf16.msra.mxu0 %v981
        %992 = vmatprep.subr.bf16.mxu0 0
        %993 = vmatpush1.bf16.msra.mxu0 %v980
        %994 = vmatprep.subr.bf16.mxu0 0
        %995 = vmatpush1.bf16.msra.mxu0 %v979
        %996 = vmatprep.subr.bf16.mxu0 0
        %997 = vmatpush1.bf16.msra.mxu0 %v978
        %998 = vmatprep.subr.bf16.mxu0 0
        %999 = vmatpush1.bf16.msra.mxu0 %v977
        %1000 = vmatprep.subr.bf16.mxu0 0
        %1001 = vmatpush1.bf16.msra.mxu0 %v976
        %1002 = vmatprep.subr.bf16.mxu0 0
        %1003 = vmatpush1.bf16.msra.mxu0 %v975
        %1004 = vmatprep.subr.bf16.mxu0 0
        %1005 = vmatpush1.bf16.msra.mxu0 %v974
        %1006 = vmatprep.subr.bf16.mxu0 0
        %1007 = vmatpush2.bf16.msra.mxu0 0
        %1008 = vmatprep.subr.bf16.mxu0 0
        %1009 = vmatpush2.bf16.msra.mxu0 0
        %1010 = vmatprep.subr.bf16.mxu0 0
        %1011 = vmatpush2.bf16.msra.mxu0 0
        %1012 = vmatprep.subr.bf16.mxu0 0
        %1013 = vmatpush2.bf16.msra.mxu0 0
        %1014 = vmatprep.subr.bf16.mxu0 0
        %1015 = vmatpush2.bf16.msra.mxu0 0
        %1016 = vmatprep.subr.bf16.mxu0 0
        %1017 = vmatpush2.bf16.msra.mxu0 0
        %1018 = vmatprep.subr.bf16.mxu0 0
        %1019 = vmatpush2.bf16.msra.mxu0 0
        %1020 = vmatprep.subr.bf16.mxu0 0
        %1021 = vmatpush2.bf16.msra.mxu0 0
        %1022 = vmatprep.mubr.bf16.mxu0 0
        %1023 = vmatmul.mubr.bf16.gmra.mxu0 %v937
        %v1024 = vpop.f32.mrf.mxu0
        %v1025 = vadd.f32 %v941, %v1024
        %v1026 = vpop.f32.mrf.mxu0
        %v1027 = vpop.f32.mrf.mxu0
        %v1028 = vpop.f32.mrf.mxu0
        %1029 = vdwg.mxu0
        %v1030 = vmul.f32 %v1025, 0.5
        %v1031 = vmul.f32 %v1025, 0.70710677
        %v1032 = verf.f32.pop %v1031
        %v1033 = vadd.f32 %v1032, 1.0
        %v1034 = vmul.f32 %v1030, %v1033
        %v1035 = vld [vmem:[#allocation14] sm:$0xf]
        %v1036 = vld [vmem:[#allocation14 + $0x4] sm:$0xf]
        %v1037 = vld [vmem:[#allocation14 + $0x8] sm:$0xf]
        %v1038 = vld [vmem:[#allocation14 + $0xc] sm:$0xf]
        %v1039 = vld [vmem:[#allocation14 + $0x10] sm:$0xf]
        %v1040 = vld [vmem:[#allocation14 + $0x14] sm:$0xf]
        %v1041 = vld [vmem:[#allocation14 + $0x18] sm:$0xf]
        %v1042 = vld [vmem:[#allocation14 + $0x1c] sm:$0xf]
        %v1043 = vld [vmem:[#allocation14 + $0x20] sm:$0xf]
        %v1044 = vld [vmem:[#allocation14 + $0x24] sm:$0xf]
        %v1045 = vld [vmem:[#allocation14 + $0x28] sm:$0xf]
        %v1046 = vld [vmem:[#allocation14 + $0x2c] sm:$0xf]
        %v1047 = vld [vmem:[#allocation14 + $0x30] sm:$0xf]
        %v1048 = vld [vmem:[#allocation14 + $0x34] sm:$0xf]
        %v1049 = vld [vmem:[#allocation14 + $0x38] sm:$0xf]
        %v1050 = vld [vmem:[#allocation14 + $0x3c] sm:$0xf]
        %v1051 = vpack.c.bf16 %v1034, %v1034
        %v1052 = vlaneseq
        %v1053 = vshrl.u32 %v1052, 7
        %v1054 = vsub.s32 5, %v1053
        %v1055 = vrot.slane %v463, %v1054
        %v1072 = vunpack.c.l.b16 %v1035
        %v1073 = vunpack.c.l.b16 %v1036
        %v1074 = vunpack.c.l.b16 %v1037
        %v1075 = vunpack.c.l.b16 %v1038
        %v1076 = vunpack.c.l.b16 %v1039
        %v1077 = vunpack.c.l.b16 %v1040
        %v1078 = vunpack.c.l.b16 %v1041
        %v1079 = vunpack.c.l.b16 %v1042
        %v1080 = vunpack.c.l.b16 %v1043
        %v1081 = vunpack.c.l.b16 %v1044
        %v1082 = vunpack.c.l.b16 %v1045
        %v1083 = vunpack.c.l.b16 %v1046
        %v1084 = vunpack.c.l.b16 %v1047
        %v1085 = vunpack.c.l.b16 %v1048
        %v1086 = vunpack.c.l.b16 %v1049
        %v1087 = vunpack.c.l.b16 %v1050
        %v1088 = vpack.c.b16 %v1073, %v1072
        %v1089 = vpack.c.b16 %v1075, %v1074
        %v1090 = vpack.c.b16 %v1077, %v1076
        %v1091 = vpack.c.b16 %v1079, %v1078
        %v1092 = vpack.c.b16 %v1081, %v1080
        %v1093 = vpack.c.b16 %v1083, %v1082
        %v1094 = vpack.c.b16 %v1085, %v1084
        %v1095 = vpack.c.b16 %v1087, %v1086
        %1104 = vmatprep.subr.bf16.mxu0 0
        %1105 = vmatpush1.bf16.msra.mxu0 %v1095
        %1106 = vmatprep.subr.bf16.mxu0 0
        %1107 = vmatpush1.bf16.msra.mxu0 %v1094
        %1108 = vmatprep.subr.bf16.mxu0 0
        %1109 = vmatpush1.bf16.msra.mxu0 %v1093
        %1110 = vmatprep.subr.bf16.mxu0 0
        %1111 = vmatpush1.bf16.msra.mxu0 %v1092
        %1112 = vmatprep.subr.bf16.mxu0 0
        %1113 = vmatpush1.bf16.msra.mxu0 %v1091
        %1114 = vmatprep.subr.bf16.mxu0 0
        %1115 = vmatpush1.bf16.msra.mxu0 %v1090
        %1116 = vmatprep.subr.bf16.mxu0 0
        %1117 = vmatpush1.bf16.msra.mxu0 %v1089
        %1118 = vmatprep.subr.bf16.mxu0 0
        %1119 = vmatpush1.bf16.msra.mxu0 %v1088
        %1120 = vmatprep.subr.bf16.mxu0 0
        %1121 = vmatpush2.bf16.msra.mxu0 0
        %1122 = vmatprep.subr.bf16.mxu0 0
        %1123 = vmatpush2.bf16.msra.mxu0 0
        %1124 = vmatprep.subr.bf16.mxu0 0
        %1125 = vmatpush2.bf16.msra.mxu0 0
        %1126 = vmatprep.subr.bf16.mxu0 0
        %1127 = vmatpush2.bf16.msra.mxu0 0
        %1128 = vmatprep.subr.bf16.mxu0 0
        %1129 = vmatpush2.bf16.msra.mxu0 0
        %1130 = vmatprep.subr.bf16.mxu0 0
        %1131 = vmatpush2.bf16.msra.mxu0 0
        %1132 = vmatprep.subr.bf16.mxu0 0
        %1133 = vmatpush2.bf16.msra.mxu0 0
        %1134 = vmatprep.subr.bf16.mxu0 0
        %1135 = vmatpush2.bf16.msra.mxu0 0
        %1136 = vmatprep.mubr.bf16.mxu0 0
        %1137 = vmatmul.mubr.bf16.gmra.mxu0 %v1051
        %v1138 = vpop.f32.mrf.mxu0
        %v1139 = vadd.f32 %v1055, %v1138
        %v1140 = vpop.f32.mrf.mxu0
        %v1141 = vpop.f32.mrf.mxu0
        %v1142 = vpop.f32.mrf.mxu0
        %1143 = vdwg.mxu0
        %v1144 = vmul.f32 %v1139, 0.5
        %v1145 = vmul.f32 %v1139, 0.70710677
        %v1146 = verf.f32.pop %v1145
        %v1147 = vadd.f32 %v1146, 1.0
        %v1148 = vmul.f32 %v1144, %v1147
        %v1149 = vld [vmem:[#allocation16] sm:$0xf]
        %v1150 = vld [vmem:[#allocation16 + $0x4] sm:$0xf]
        %v1151 = vld [vmem:[#allocation16 + $0x8] sm:$0xf]
        %v1152 = vld [vmem:[#allocation16 + $0xc] sm:$0xf]
        %v1153 = vld [vmem:[#allocation16 + $0x10] sm:$0xf]
        %v1154 = vld [vmem:[#allocation16 + $0x14] sm:$0xf]
        %v1155 = vld [vmem:[#allocation16 + $0x18] sm:$0xf]
        %v1156 = vld [vmem:[#allocation16 + $0x1c] sm:$0xf]
        %v1157 = vld [vmem:[#allocation16 + $0x20] sm:$0xf]
        %v1158 = vld [vmem:[#allocation16 + $0x24] sm:$0xf]
        %v1159 = vld [vmem:[#allocation16 + $0x28] sm:$0xf]
        %v1160 = vld [vmem:[#allocation16 + $0x2c] sm:$0xf]
        %v1161 = vld [vmem:[#allocation16 + $0x30] sm:$0xf]
        %v1162 = vld [vmem:[#allocation16 + $0x34] sm:$0xf]
        %v1163 = vld [vmem:[#allocation16 + $0x38] sm:$0xf]
        %v1164 = vld [vmem:[#allocation16 + $0x3c] sm:$0xf]
        %v1165 = vpack.c.bf16 %v1148, %v1148
        %v1166 = vlaneseq
        %v1167 = vshrl.u32 %v1166, 7
        %v1168 = vsub.s32 6, %v1167
        %v1169 = vrot.slane %v463, %v1168
        %v1186 = vunpack.c.l.b16 %v1149
        %v1187 = vunpack.c.l.b16 %v1150
        %v1188 = vunpack.c.l.b16 %v1151
        %v1189 = vunpack.c.l.b16 %v1152
        %v1190 = vunpack.c.l.b16 %v1153
        %v1191 = vunpack.c.l.b16 %v1154
        %v1192 = vunpack.c.l.b16 %v1155
        %v1193 = vunpack.c.l.b16 %v1156
        %v1194 = vunpack.c.l.b16 %v1157
        %v1195 = vunpack.c.l.b16 %v1158
        %v1196 = vunpack.c.l.b16 %v1159
        %v1197 = vunpack.c.l.b16 %v1160
        %v1198 = vunpack.c.l.b16 %v1161
        %v1199 = vunpack.c.l.b16 %v1162
        %v1200 = vunpack.c.l.b16 %v1163
        %v1201 = vunpack.c.l.b16 %v1164
        %v1202 = vpack.c.b16 %v1187, %v1186
        %v1203 = vpack.c.b16 %v1189, %v1188
        %v1204 = vpack.c.b16 %v1191, %v1190
        %v1205 = vpack.c.b16 %v1193, %v1192
        %v1206 = vpack.c.b16 %v1195, %v1194
        %v1207 = vpack.c.b16 %v1197, %v1196
        %v1208 = vpack.c.b16 %v1199, %v1198
        %v1209 = vpack.c.b16 %v1201, %v1200
        %1218 = vmatprep.subr.bf16.mxu0 0
        %1219 = vmatpush1.bf16.msra.mxu0 %v1209
        %1220 = vmatprep.subr.bf16.mxu0 0
        %1221 = vmatpush1.bf16.msra.mxu0 %v1208
        %1222 = vmatprep.subr.bf16.mxu0 0
        %1223 = vmatpush1.bf16.msra.mxu0 %v1207
        %1224 = vmatprep.subr.bf16.mxu0 0
        %1225 = vmatpush1.bf16.msra.mxu0 %v1206
        %1226 = vmatprep.subr.bf16.mxu0 0
        %1227 = vmatpush1.bf16.msra.mxu0 %v1205
        %1228 = vmatprep.subr.bf16.mxu0 0
        %1229 = vmatpush1.bf16.msra.mxu0 %v1204
        %1230 = vmatprep.subr.bf16.mxu0 0
        %1231 = vmatpush1.bf16.msra.mxu0 %v1203
        %1232 = vmatprep.subr.bf16.mxu0 0
        %1233 = vmatpush1.bf16.msra.mxu0 %v1202
        %1234 = vmatprep.subr.bf16.mxu0 0
        %1235 = vmatpush2.bf16.msra.mxu0 0
        %1236 = vmatprep.subr.bf16.mxu0 0
        %1237 = vmatpush2.bf16.msra.mxu0 0
        %1238 = vmatprep.subr.bf16.mxu0 0
        %1239 = vmatpush2.bf16.msra.mxu0 0
        %1240 = vmatprep.subr.bf16.mxu0 0
        %1241 = vmatpush2.bf16.msra.mxu0 0
        %1242 = vmatprep.subr.bf16.mxu0 0
        %1243 = vmatpush2.bf16.msra.mxu0 0
        %1244 = vmatprep.subr.bf16.mxu0 0
        %1245 = vmatpush2.bf16.msra.mxu0 0
        %1246 = vmatprep.subr.bf16.mxu0 0
        %1247 = vmatpush2.bf16.msra.mxu0 0
        %1248 = vmatprep.subr.bf16.mxu0 0
        %1249 = vmatpush2.bf16.msra.mxu0 0
        %1250 = vmatprep.mubr.bf16.mxu0 0
        %1251 = vmatmul.mubr.bf16.gmra.mxu0 %v1165
        %v1252 = vpop.f32.mrf.mxu0
        %v1253 = vadd.f32 %v1169, %v1252
        %v1254 = vpop.f32.mrf.mxu0
        %v1255 = vpop.f32.mrf.mxu0
        %v1256 = vpop.f32.mrf.mxu0
        %1257 = vdwg.mxu0
        %1258 = vst [vmem:[%s461] sm:$0xff] %v1253
        %s1259 = sand.u32 %s232, 1
        %s1260 = scalar_lea.sflag [#allocation4], %s1259
        %s1261 = sand.u32 %s232, 1
        %s1262 = smul.addr %s1261, 8
        %s1263 = scalar_lea.vmem [#allocation17], %s1262
        // Predicated region
        $region93: #{tpu_custom_call.1} parent=55 // pred_check
          %p1264 = pneg %p242
        $region94: #{tpu_custom_call.1} parent=55 // pred_check_branch
          %1266 = sbr.rel (%p1264) target = $region96
        $region95: #{tpu_custom_call.1} parent=55 // pred_region
          %s1268 = ssub.s32 128, 128
          %1269 = vsyncadd %s1260, %s1268
          %s1270 = smul.addr %s30, 128
          %s1271 = scalar_lea.hbm %s9, %s1270
          %s1273 = sshll.u32 %s1263, 4
          %s1274 = int_to_ptr.vmem [resolvable:$true] %s1273
          %1276 = dma.vmem_to_hbm [thread:$0]  %s1274, 128, %s1271, %s1260
        $region96: #{tpu_custom_call.1} parent=55 // pred_fallthru
          _
      $region56: #{tpu_custom_call.1} parent=5 // pred_fallthru
        _
      %p1277 = scmp.le.s32.totalorder 2, %s25
      // Predicated region
      $region97: #{tpu_custom_call.1} parent=5 // pred_check
        %p1278 = pneg %p1277
      $region98: #{tpu_custom_call.1} parent=5 // pred_check_branch
        %1280 = sbr.rel (%p1278) target = $region100
      $region99: #{tpu_custom_call.1} parent=5 // pred_region
        %s1281 = ssub.s32 %s25, 2
        // Predicated region
        $region101: #{tpu_custom_call.1} parent=99 // pred_check
          %p1282 = pneg %p248
        $region102: #{tpu_custom_call.1} parent=99 // pred_check_branch
          %1284 = sbr.rel (%p1282) target = $region104
        $region103: #{tpu_custom_call.1} parent=99 // pred_region
          %s1285 = sand.u32 %s233, 1
          %s1286 = scalar_lea.sflag [#allocation4], %s1285
          %s1287 = sand.u32 %s233, 1
          %s1288 = smul.addr %s1287, 8
          %s1289 = scalar_lea.vmem [#allocation17], %s1288
          %1290 = dma.done %s1286, 128
        $region104: #{tpu_custom_call.1} parent=99 // pred_fallthru
          _
      $region100: #{tpu_custom_call.1} parent=5 // pred_fallthru
        _
    $region6: #{tpu_custom_call.1} parent=1 // loop_footer
      %s29 = sadd.s32 1, %s25
    $region7: #{tpu_custom_call.1} parent=1 // loop_footer_branch
      %24 = sbr.rel target = $region3
    $region8: #{tpu_custom_call.1} parent=1 // loop_exit
      _
    %1291 = vsyncpa [#allocation3], 1
    %s1292 = scalar_lea.sflag [#allocation3], 1
    %1293 = vsyncpa %s1292, 1
    %1294 = vsyncpa [#allocation6], 1
    %1295 = vsyncpa [#allocation9], 1
    %1296 = vsyncpa [#allocation12], 1
    %1297 = vsyncpa [#allocation15], 1
    %1298 = vsyncpa [#allocation4], 1
    %s1299 = scalar_lea.sflag [#allocation4], 1
    %1300 = vsyncpa %s1299, 1

</llo_original>
